<compile_context>
chip_gen: v6e
topology: v6e:2x2x1
jax: 0.10.0
libtpu: 0.0.40
codegen_flags: <defaults>
</compile_context>

<pallas_src>
import math

import numpy as np
import jax
import jax.numpy as jnp
from jax.experimental import pallas as pl
from jax.experimental.pallas import tpu as pltpu


_LANE = 128
_SUBLANE = 8


def _ceil_to(n, m):
    return ((n + m - 1) // m) * m


# ----------------------------------------------------------------------------
# Pallas kernels (one pallas_call per tree, grid=(1,), in-kernel fori_loop)
# ----------------------------------------------------------------------------
def _encoder_tree_kernel(sched_ref,                 # SMEM (2, N) int32 schedule
                         x_ref,                     # (N, Bp, Ip) node targets
                         wi_ref, bi_ref,            # (Ip, 3Hp), (1, 3Hp)
                         wh_ref, bh_ref,            # (2Hp, 3Hp), (1, 3Hp)
                         whead_ref, bhead_ref,      # (Hp, 2Op), (1, 2Op)
                         eps_ref,                   # (Bp, Op)
                         mu_ref, lv_ref, z_ref,     # outputs (Bp, Op)
                         hbuf_ref):                 # scratch (N+1, Bp, Hp)
    n = x_ref.shape[0]
    hp = hbuf_ref.shape[-1]

    # Slot 0 is the "missing child" zero hidden state; every other slot is
    # written (post-order) before it is read, so no full memset is needed.
    hbuf_ref[0] = jnp.zeros(hbuf_ref.shape[1:], hbuf_ref.dtype)

    wi = wi_ref[...]
    bi = bi_ref[...]
    wh = wh_ref[...]
    bh = bh_ref[...]

    def body(i, carry):
        x = x_ref[i]                               # (Bp, Ip)
        h1 = hbuf_ref[sched_ref[0, i]]             # (Bp, Hp)
        h2 = hbuf_ref[sched_ref[1, i]]             # (Bp, Hp)
        h12 = jnp.concatenate([h1, h2], axis=-1)   # (Bp, 2Hp)

        # Fused gates: columns are [r | z | n], each Hp wide.
        gx = jnp.dot(x, wi, preferred_element_type=jnp.float32) + bi
        gh = jnp.dot(h12, wh, preferred_element_type=jnp.float32) + bh

        r = jax.nn.sigmoid(gx[:, :hp] + gh[:, :hp])
        zg = jax.nn.sigmoid(gx[:, hp:2 * hp] + gh[:, hp:2 * hp])
        ng = jnp.tanh(gx[:, 2 * hp:] + r * gh[:, 2 * hp:])
        # (1 - z)*n + z/2*h1 + z/2*h2  ==  n + z*(0.5*(h1+h2) - n)
        hbuf_ref[i + 1] = ng + zg * (0.5 * (h1 + h2) - ng)
        return carry

    jax.lax.fori_loop(0, n, body, 0, unroll=(n <= 32))

    # mu/logvar heads + reparameterized sample, fused into the same kernel.
    hroot = hbuf_ref[n]
    op = mu_ref.shape[-1]
    heads = (jnp.dot(hroot, whead_ref[...],
                     preferred_element_type=jnp.float32) + bhead_ref[...])
    mu = heads[:, :op]
    lv = heads[:, op:]
    mu_ref[...] = mu
    lv_ref[...] = lv
    z_ref[...] = mu + eps_ref[...] * jnp.exp(0.5 * lv)


def _decoder_tree_kernel(sched_ref,                 # SMEM (2, N): parent, side
                         z_ref,                     # (Bp, Op) latent
                         wz2h_ref, bz2h_ref,        # (Op, Hp), (1, Hp)
                         wh2o_ref, bh2o_ref,        # (Hp, Odp), (1, Odp)
                         wi_ref, bi_ref,            # (Odp, 6Hp), (1, 6Hp)
                         wh_ref, bh_ref,            # (Hp, 6Hp), (1, 6Hp)
                         mask_ref,                  # (1, Odp) additive lane mask
                         pred_ref,                  # out (N, Bp, Odp)
                         cbuf_ref):                 # scratch (2N, Bp, Hp)
    n = pred_ref.shape[0]
    hp = cbuf_ref.shape[-1]
    h2 = 2 * hp

    wh2o = wh2o_ref[...]
    bh2o = bh2o_ref[...]
    wi = wi_ref[...]
    bi = bi_ref[...]
    wh = wh_ref[...]
    bh = bh_ref[...]
    mask = mask_ref[...]

    def node(i, hid):
        # prediction = h2o(hidden); stored raw per node (torch semantics).
        logits = jnp.dot(hid, wh2o, preferred_element_type=jnp.float32) + bh2o
        pred_ref[i] = logits

        # softmax over the real (unpadded) output lanes only (additive mask).
        masked = logits + mask
        m = jnp.max(masked, axis=-1, keepdims=True)
        e = jnp.exp(masked - m)
        probs = e * pl.reciprocal(jnp.sum(e, axis=-1, keepdims=True), approx=True)

        # GRU122: fused gates, columns are [r | z | n], each 2*Hp wide
        # (within a gate: left half at [0,Hp), right half at [Hp,2Hp)).
        gx = jnp.dot(probs, wi, preferred_element_type=jnp.float32) + bi
        gh = jnp.dot(hid, wh, preferred_element_type=jnp.float32) + bh

        r = jax.nn.sigmoid(gx[:, :h2] + gh[:, :h2])
        zg = jax.nn.sigmoid(gx[:, h2:2 * h2] + gh[:, h2:2 * h2])
        ng = jnp.tanh(gx[:, 2 * h2:] + r * gh[:, 2 * h2:])

        nl, nr = ng[:, :hp], ng[:, hp:h2]
        zl, zr = zg[:, :hp], zg[:, hp:h2]
        # out = (1 - z)*n + z*[h, h]  -> halves split without a lane concat
        cbuf_ref[2 * i] = nl + zl * (hid - nl)        # left child hidden
        cbuf_ref[2 * i + 1] = nr + zr * (hid - nr)    # right child hidden

    # Root hidden = z2h(z).  Handled once outside the loop, so no per-node
    # select and no per-node z2h matmul on the serial path.
    hid_root = (jnp.dot(z_ref[...], wz2h_ref[...],
                        preferred_element_type=jnp.float32) + bz2h_ref[...])
    node(0, hid_root)

    def body(i, carry):
        parent = sched_ref[0, i]
        side = sched_ref[1, i]
        node(i, cbuf_ref[2 * parent + side])
        return carry

    jax.lax.fori_loop(1, n, body, 0, unroll=(n <= 32))


# ----------------------------------------------------------------------------
# pallas_call wrappers (one call per tree)
# ----------------------------------------------------------------------------
def _full_spec(arr):
    nd = arr.ndim
    return pl.BlockSpec(arr.shape, lambda i, s, nd=nd: (0,) * nd)


@jax.jit
def _encoder_pallas(sched, targets, wi, bi, wh, bh, whead, bhead, eps):
    n_nodes, bp, _ = targets.shape
    hp = wh.shape[0] // 2
    op = eps.shape[1]

    grid_spec = pltpu.PrefetchScalarGridSpec(
        num_scalar_prefetch=1,
        grid=(1,),
        in_specs=[_full_spec(targets),
                  _full_spec(wi), _full_spec(bi),
                  _full_spec(wh), _full_spec(bh),
                  _full_spec(whead), _full_spec(bhead), _full_spec(eps)],
        out_specs=(pl.BlockSpec((bp, op), lambda i, s: (0, 0)),
                   pl.BlockSpec((bp, op), lambda i, s: (0, 0)),
                   pl.BlockSpec((bp, op), lambda i, s: (0, 0))),
        scratch_shapes=[pltpu.VMEM((n_nodes + 1, bp, hp), jnp.float32)],
    )
    return pl.pallas_call(
        _encoder_tree_kernel,
        grid_spec=grid_spec,
        out_shape=(jax.ShapeDtypeStruct((bp, op), jnp.float32),
                   jax.ShapeDtypeStruct((bp, op), jnp.float32),
                   jax.ShapeDtypeStruct((bp, op), jnp.float32)),
        compiler_params=pltpu.CompilerParams(
            dimension_semantics=("arbitrary",)),
    )(sched, targets, wi, bi, wh, bh, whead, bhead, eps)


@jax.jit
def _decoder_pallas(sched, z_p, wz2h, bz2h, wh2o, bh2o, wi, bi, wh, bh, mask):
    n_nodes = sched.shape[1]
    bp = z_p.shape[0]
    hp = wz2h.shape[1]
    odp = wh2o.shape[1]

    grid_spec = pltpu.PrefetchScalarGridSpec(
        num_scalar_prefetch=1,
        grid=(1,),
        in_specs=[_full_spec(z_p),
                  _full_spec(wz2h), _full_spec(bz2h),
                  _full_spec(wh2o), _full_spec(bh2o),
                  _full_spec(wi), _full_spec(bi),
                  _full_spec(wh), _full_spec(bh), _full_spec(mask)],
        out_specs=pl.BlockSpec((n_nodes, bp, odp), lambda i, s: (0, 0, 0)),
        scratch_shapes=[pltpu.VMEM((2 * n_nodes, bp, hp), jnp.float32)],
    )
    return pl.pallas_call(
        _decoder_tree_kernel,
        grid_spec=grid_spec,
        out_shape=jax.ShapeDtypeStruct((n_nodes, bp, odp), jnp.float32),
        compiler_params=pltpu.CompilerParams(
            dimension_semantics=("arbitrary",)),
    )(sched, z_p, wz2h, bz2h, wh2o, bh2o, wi, bi, wh, bh, mask)


# ----------------------------------------------------------------------------
# Parameter init (torch-style: xavier_uniform weights, Linear-default biases)
# and padded / fused packing.
# ----------------------------------------------------------------------------
def _xavier(key, fan_in, fan_out):
    bound = math.sqrt(6.0 / (fan_in + fan_out))
    # stored transposed: (in, out); kernel computes y = x @ W + b
    return jax.random.uniform(key, (fan_in, fan_out), jnp.float32, -bound, bound)


def _bias(key, fan_in, fan_out):
    bound = 1.0 / math.sqrt(fan_in)
    return jax.random.uniform(key, (fan_out,), jnp.float32, -bound, bound)


def init_hvae_params(key, input_size, hidden_size, output_size):
    keys = iter(jax.random.split(key, 64))
    raw = {}

    def lin(name, fi, fo):
        raw[name + "_w"] = _xavier(next(keys), fi, fo)
        raw[name + "_b"] = _bias(next(keys), fi, fo)

    # Encoder GRU221 + heads
    lin("wir", input_size, hidden_size);      lin("whr", 2 * hidden_size, hidden_size)
    lin("wiz", input_size, hidden_size);      lin("whz", 2 * hidden_size, hidden_size)
    lin("win", input_size, hidden_size);      lin("whn", 2 * hidden_size, hidden_size)
    lin("mu", hidden_size, output_size);      lin("logvar", hidden_size, output_size)
    # Decoder (Decoder(output_size, hidden_size, input_size) in HVAE)
    lin("z2h", output_size, hidden_size);     lin("h2o", hidden_size, input_size)
    lin("g_wir", input_size, 2 * hidden_size); lin("g_whr", hidden_size, 2 * hidden_size)
    lin("g_wiz", input_size, 2 * hidden_size); lin("g_whz", hidden_size, 2 * hidden_size)
    lin("g_win", input_size, 2 * hidden_size); lin("g_whn", hidden_size, 2 * hidden_size)
    return raw


def _pack_encoder(raw, I, H, O, Ip, Hp, Op):
    wi = jnp.zeros((Ip, 3 * Hp), jnp.float32)
    bi = jnp.zeros((1, 3 * Hp), jnp.float32)
    wh = jnp.zeros((2 * Hp, 3 * Hp), jnp.float32)   # rows [0,Hp)=h1, [Hp,2Hp)=h2
    bh = jnp.zeros((1, 3 * Hp), jnp.float32)
    for g, name in enumerate(("r", "z", "n")):
        off = g * Hp
        wi = wi.at[:I, off:off + H].set(raw[f"wi{name}_w"])
        bi = bi.at[0, off:off + H].set(raw[f"wi{name}_b"])
        wh = wh.at[:H, off:off + H].set(raw[f"wh{name}_w"][:H])           # h1 rows
        wh = wh.at[Hp:Hp + H, off:off + H].set(raw[f"wh{name}_w"][H:])    # h2 rows
        bh = bh.at[0, off:off + H].set(raw[f"wh{name}_b"])
    whead = jnp.zeros((Hp, 2 * Op), jnp.float32)
    bhead = jnp.zeros((1, 2 * Op), jnp.float32)
    whead = whead.at[:H, :O].set(raw["mu_w"]).at[:H, Op:Op + O].set(raw["logvar_w"])
    bhead = bhead.at[0, :O].set(raw["mu_b"]).at[0, Op:Op + O].set(raw["logvar_b"])
    return dict(wi=wi, bi=bi, wh=wh, bh=bh, whead=whead, bhead=bhead)


def _pack_decoder(raw, I, H, O, Ip, Hp, Op):
    wz2h = jnp.zeros((Op, Hp), jnp.float32).at[:O, :H].set(raw["z2h_w"])
    bz2h = jnp.zeros((1, Hp), jnp.float32).at[0, :H].set(raw["z2h_b"])
    wh2o = jnp.zeros((Hp, Ip), jnp.float32).at[:H, :I].set(raw["h2o_w"])
    bh2o = jnp.zeros((1, Ip), jnp.float32).at[0, :I].set(raw["h2o_b"])
    wi = jnp.zeros((Ip, 6 * Hp), jnp.float32)
    bi = jnp.zeros((1, 6 * Hp), jnp.float32)
    wh = jnp.zeros((Hp, 6 * Hp), jnp.float32)
    bh = jnp.zeros((1, 6 * Hp), jnp.float32)
    for g, name in enumerate(("r", "z", "n")):
        off = g * 2 * Hp
        wgi, bgi = raw[f"g_wi{name}_w"], raw[f"g_wi{name}_b"]
        wgh, bgh = raw[f"g_wh{name}_w"], raw[f"g_wh{name}_b"]
        # left half -> [off, off+H), right half -> [off+Hp, off+Hp+H)
        wi = wi.at[:I, off:off + H].set(wgi[:, :H])
        wi = wi.at[:I, off + Hp:off + Hp + H].set(wgi[:, H:])
        bi = bi.at[0, off:off + H].set(bgi[:H])
        bi = bi.at[0, off + Hp:off + Hp + H].set(bgi[H:])
        wh = wh.at[:H, off:off + H].set(wgh[:, :H])
        wh = wh.at[:H, off + Hp:off + Hp + H].set(wgh[:, H:])
        bh = bh.at[0, off:off + H].set(bgh[:H])
        bh = bh.at[0, off + Hp:off + Hp + H].set(bgh[H:])
    return dict(wz2h=wz2h, bz2h=bz2h, wh2o=wh2o, bh2o=bh2o,
                wi=wi, bi=bi, wh=wh, bh=bh)


# ----------------------------------------------------------------------------
# Tree structure + host-side schedule flattening
# ----------------------------------------------------------------------------
class TreeNode:
    def __init__(self, target, left=None, right=None):
        self.target = target        # (B, 1, input_size)
        self.left = left
        self.right = right
        self.prediction = None


def _flatten_postorder(tree):
    """Post-order list of (node, left_slot, right_slot); slot 0 = zeros."""
    nodes = []

    def rec(t):
        ls = rec(t.left) if t.left is not None else 0
        rs = rec(t.right) if t.right is not None else 0
        nodes.append((t, ls, rs))
        return len(nodes)           # slot index of this node (1-based)

    rec(tree)
    return nodes


def _flatten_preorder(tree):
    """Pre-order list of (node, parent_index, side); root first."""
    nodes = []

    def rec(t, parent, side):
        idx = len(nodes)
        nodes.append((t, parent, side))
        if t.left is not None:
            rec(t.left, idx, 0)
        if t.right is not None:
            rec(t.right, idx, 1)

    rec(tree, 0, 0)
    return nodes


# ----------------------------------------------------------------------------
# HVAE
# ----------------------------------------------------------------------------
class HVAE:
    def __init__(self, input_size, output_size, hidden_size=None, *, key):
        if hidden_size is None:
            hidden_size = output_size
        self.I, self.H, self.O = input_size, hidden_size, output_size
        self.Ip = _ceil_to(input_size, _LANE)
        self.Hp = _ceil_to(hidden_size, _LANE)
        self.Op = _ceil_to(output_size, _LANE)
        raw = init_hvae_params(key, input_size, hidden_size, output_size)
        self.enc = _pack_encoder(raw, self.I, self.H, self.O, self.Ip, self.Hp, self.Op)
        self.dec = _pack_decoder(raw, self.I, self.H, self.O, self.Ip, self.Hp, self.Op)
        # additive softmax lane mask: 0 on real output lanes, -1e30 on padding
        self.dec_mask = jnp.zeros((1, self.Ip), jnp.float32).at[0, self.I:].set(-1e30)

    # encoder (+ fused reparameterized sample)
    def _encode_and_sample(self, tree, eps):
        nodes = _flatten_postorder(tree)
        n = len(nodes)
        B = tree.target.shape[0]
        Bp = _ceil_to(B, _SUBLANE)
        tstack = jnp.stack([t.target.reshape(B, self.I) for t, _, _ in nodes])
        targets = jnp.zeros((n, Bp, self.Ip), jnp.float32).at[:, :B, :self.I].set(tstack)
        sched = jnp.asarray(np.array([[ls for _, ls, _ in nodes],
                                      [rs for _, _, rs in nodes]], dtype=np.int32))
        eps_p = jnp.zeros((Bp, self.Op), jnp.float32).at[:B, :self.O].set(
            eps.reshape(B, self.O))
        e = self.enc
        mu_p, lv_p, z_p = _encoder_pallas(sched, targets, e["wi"], e["bi"],
                                          e["wh"], e["bh"],
                                          e["whead"], e["bhead"], eps_p)
        mu = mu_p[:B, :self.O].reshape(B, 1, self.O)
        logvar = lv_p[:B, :self.O].reshape(B, 1, self.O)
        return mu, logvar, z_p

    def _decode_into_tree(self, z_p, tree, B):
        nodes = _flatten_preorder(tree)
        sched = jnp.asarray(np.array([[p for _, p, _ in nodes],
                                      [s for _, _, s in nodes]], dtype=np.int32))
        d = self.dec
        preds = _decoder_pallas(sched, z_p, d["wz2h"], d["bz2h"], d["wh2o"],
                                d["bh2o"], d["wi"], d["bi"], d["wh"], d["bh"],
                                self.dec_mask)
        # one device slice for every node, then cheap per-node views
        preds = preds[:, :B, None, :self.I]          # (N, B, 1, I)
        for k, (node, _, _) in enumerate(nodes):
            node.prediction = preds[k]
        return tree

    def forward(self, tree, key):
        B = tree.target.shape[0]
        eps = jax.random.normal(key, (B, 1, self.O), jnp.float32)
        mu, logvar, z_p = self._encode_and_sample(tree, eps)
        out_tree = self._decode_into_tree(z_p, tree, B)
        return mu, logvar, out_tree

    def encode(self, tree, key):
        B = tree.target.shape[0]
        eps = jax.random.normal(key, (B, 1, self.O), jnp.float32)
        mu, logvar, _ = self._encode_and_sample(tree, eps)
        return mu, logvar


# ----------------------------------------------------------------------------
# Demo
# ----------------------------------------------------------------------------
if __name__ == "__main__":
    B, INPUT, HIDDEN, OUTPUT = 2, 8, 32, 16

    key = jax.random.PRNGKey(0)
    k_params, k_eps, k_t1, k_t2, k_t3, k_t4 = jax.random.split(key, 6)

    model = HVAE(INPUT, OUTPUT, HIDDEN, key=k_params)

    # small deterministic binary tree of 4 nodes
    leaf_a = TreeNode(jax.random.normal(k_t1, (B, 1, INPUT), jnp.float32))
    leaf_b = TreeNode(jax.random.normal(k_t2, (B, 1, INPUT), jnp.float32))
    mid = TreeNode(jax.random.normal(k_t3, (B, 1, INPUT), jnp.float32),
                   left=leaf_b, right=None)
    root = TreeNode(jax.random.normal(k_t4, (B, 1, INPUT), jnp.float32),
                    left=leaf_a, right=mid)

    mu, logvar, out_tree = model.forward(root, k_eps)
    preds = [node.prediction for node, _, _ in _flatten_preorder(out_tree)]
    jax.block_until_ready((mu, logvar, preds))

    assert mu.shape == (B, 1, OUTPUT) and logvar.shape == (B, 1, OUTPUT)
    assert bool(jnp.all(jnp.isfinite(mu))) and bool(jnp.all(jnp.isfinite(logvar)))
    assert len(preds) == 4
    for p in preds:
        assert p.shape == (B, 1, INPUT)
        assert bool(jnp.all(jnp.isfinite(p)))
    print("KERNEL_OK")
</pallas_src>

<mosaic_0001>
module attributes {stable_mosaic.version = 11 : i64} {
  func.func @_encoder_tree_kernel(%arg0: i32, %arg1: memref<2x4xi32, #tpu.memory_space<smem>>, %arg2: memref<4x8x128xf32, #tpu.memory_space<vmem>>, %arg3: memref<128x384xf32, #tpu.memory_space<vmem>>, %arg4: memref<1x384xf32, #tpu.memory_space<vmem>>, %arg5: memref<256x384xf32, #tpu.memory_space<vmem>>, %arg6: memref<1x384xf32, #tpu.memory_space<vmem>>, %arg7: memref<128x256xf32, #tpu.memory_space<vmem>>, %arg8: memref<1x256xf32, #tpu.memory_space<vmem>>, %arg9: memref<8x128xf32, #tpu.memory_space<vmem>>, %arg10: memref<8x128xf32, #tpu.memory_space<vmem>>, %arg11: memref<8x128xf32, #tpu.memory_space<vmem>>, %arg12: memref<8x128xf32, #tpu.memory_space<vmem>>, %arg13: memref<5x8x128xf32, #tpu.memory_space<vmem>>) attributes {dimension_semantics = [#tpu.dimension_semantics<arbitrary>], iteration_bounds = array<i64: 1>, scalar_prefetch = 1 : i64, scratch_operands = 1 : i64, tpu.core_type = #tpu.core_type<tc>, window_params = [{pipeline_mode = #tpu.pipeline_mode<synchronous>, transform_indices = @transform_0, window_bounds = array<i64: 4, 8, 128>}, {pipeline_mode = #tpu.pipeline_mode<synchronous>, transform_indices = @transform_1, window_bounds = array<i64: 128, 384>}, {pipeline_mode = #tpu.pipeline_mode<synchronous>, transform_indices = @transform_2, window_bounds = array<i64: 1, 384>}, {pipeline_mode = #tpu.pipeline_mode<synchronous>, transform_indices = @transform_3, window_bounds = array<i64: 256, 384>}, {pipeline_mode = #tpu.pipeline_mode<synchronous>, transform_indices = @transform_4, window_bounds = array<i64: 1, 384>}, {pipeline_mode = #tpu.pipeline_mode<synchronous>, transform_indices = @transform_5, window_bounds = array<i64: 128, 256>}, {pipeline_mode = #tpu.pipeline_mode<synchronous>, transform_indices = @transform_6, window_bounds = array<i64: 1, 256>}, {pipeline_mode = #tpu.pipeline_mode<synchronous>, transform_indices = @transform_7, window_bounds = array<i64: 8, 128>}, {pipeline_mode = #tpu.pipeline_mode<synchronous>, transform_indices = @transform_8, window_bounds = array<i64: 8, 128>}, {pipeline_mode = #tpu.pipeline_mode<synchronous>, transform_indices = @transform_9, window_bounds = array<i64: 8, 128>}, {pipeline_mode = #tpu.pipeline_mode<synchronous>, transform_indices = @transform_10, window_bounds = array<i64: 8, 128>}]} {
    %cst = arith.constant 0.000000e+00 : f32
    %0 = vector.broadcast %cst : f32 to vector<8x128xf32>
    %c0 = arith.constant 0 : index
    %c0_0 = arith.constant 0 : index
    %c0_1 = arith.constant 0 : index
    %1 = vector.load %arg13[%c0, %c0_0, %c0_1] : memref<5x8x128xf32, #tpu.memory_space<vmem>>, vector<1x8x128xf32>
    %2 = vector.shape_cast %1 : vector<1x8x128xf32> to vector<8x128xf32>
    %3 = vector.shape_cast %0 : vector<8x128xf32> to vector<1x8x128xf32>
    tpu.vector_store %arg13[%c0, %c0_0, %c0_1], %3 {strides = array<i32>} : memref<5x8x128xf32, #tpu.memory_space<vmem>>, vector<1x8x128xf32>,
    %c0_2 = arith.constant 0 : index
    %c0_3 = arith.constant 0 : index
    %4 = vector.load %arg3[%c0_2, %c0_3] : memref<128x384xf32, #tpu.memory_space<vmem>>, vector<128x384xf32>
    %c0_4 = arith.constant 0 : index
    %c0_5 = arith.constant 0 : index
    %5 = vector.load %arg4[%c0_4, %c0_5] : memref<1x384xf32, #tpu.memory_space<vmem>>, vector<1x384xf32>
    %c0_6 = arith.constant 0 : index
    %c0_7 = arith.constant 0 : index
    %6 = vector.load %arg5[%c0_6, %c0_7] : memref<256x384xf32, #tpu.memory_space<vmem>>, vector<256x384xf32>
    %c0_8 = arith.constant 0 : index
    %c0_9 = arith.constant 0 : index
    %7 = vector.load %arg6[%c0_8, %c0_9] : memref<1x384xf32, #tpu.memory_space<vmem>>, vector<1x384xf32>
    %c0_i32 = arith.constant 0 : i32
    %8 = arith.index_cast %c0_i32 : i32 to index
    %c0_10 = arith.constant 0 : index
    %c0_11 = arith.constant 0 : index
    %9 = vector.load %arg2[%8, %c0_10, %c0_11] : memref<4x8x128xf32, #tpu.memory_space<vmem>>, vector<1x8x128xf32>
    %10 = vector.shape_cast %9 : vector<1x8x128xf32> to vector<8x128xf32>
    %c0_12 = arith.constant 0 : index
    %11 = arith.index_cast %c0_i32 : i32 to index
    %12 = memref.load %arg1[%c0_12, %11] : memref<2x4xi32, #tpu.memory_space<smem>>
    %13 = arith.index_cast %12 : i32 to index
    %c0_13 = arith.constant 0 : index
    %c0_14 = arith.constant 0 : index
    %14 = vector.load %arg13[%13, %c0_13, %c0_14] : memref<5x8x128xf32, #tpu.memory_space<vmem>>, vector<1x8x128xf32>
    %15 = vector.shape_cast %14 : vector<1x8x128xf32> to vector<8x128xf32>
    %c1 = arith.constant 1 : index
    %16 = arith.index_cast %c0_i32 : i32 to index
    %17 = memref.load %arg1[%c1, %16] : memref<2x4xi32, #tpu.memory_space<smem>>
    %18 = arith.index_cast %17 : i32 to index
    %c0_15 = arith.constant 0 : index
    %c0_16 = arith.constant 0 : index
    %19 = vector.load %arg13[%18, %c0_15, %c0_16] : memref<5x8x128xf32, #tpu.memory_space<vmem>>, vector<1x8x128xf32>
    %20 = vector.shape_cast %19 : vector<1x8x128xf32> to vector<8x128xf32>
    %21 = tpu.concatenate %15, %20 in 1 : vector<8x128xf32>, vector<8x128xf32> -> vector<8x256xf32>
    %cst_17 = arith.constant dense<0.000000e+00> : vector<8x384xf32>
    %22 = tpu.matmul %10, %4, %cst_17 {dimension_numbers = #tpu.dot_dimension_numbers<[1], [0], [0], [1], [0, 0, 1, 1], [], []>} : vector<8x128xf32>, vector<128x384xf32>, vector<8x384xf32> -> vector<8x384xf32>
    %23 = vector.broadcast %5 : vector<1x384xf32> to vector<8x384xf32>
    %24 = arith.addf %22, %23 : vector<8x384xf32>
    %cst_18 = arith.constant dense<0.000000e+00> : vector<8x384xf32>
    %25 = tpu.matmul %21, %6, %cst_18 {dimension_numbers = #tpu.dot_dimension_numbers<[1], [0], [0], [1], [0, 0, 1, 1], [], []>} : vector<8x256xf32>, vector<256x384xf32>, vector<8x384xf32> -> vector<8x384xf32>
    %26 = vector.broadcast %7 : vector<1x384xf32> to vector<8x384xf32>
    %27 = arith.addf %25, %26 : vector<8x384xf32>
    %28 = vector.extract_strided_slice %24 {offsets = [0, 0], sizes = [8, 128], strides = [1, 1]} : vector<8x384xf32> to vector<8x128xf32>
    %29 = vector.extract_strided_slice %27 {offsets = [0, 0], sizes = [8, 128], strides = [1, 1]} : vector<8x384xf32> to vector<8x128xf32>
    %30 = arith.addf %28, %29 : vector<8x128xf32>
    %31 = arith.negf %30 : vector<8x128xf32>
    %32 = math.exp %31 : vector<8x128xf32>
    %cst_19 = arith.constant 1.000000e+00 : f32
    %33 = vector.broadcast %cst_19 : f32 to vector<8x128xf32>
    %34 = arith.addf %33, %32 : vector<8x128xf32>
    %35 = arith.divf %33, %34 : vector<8x128xf32>
    %36 = vector.extract_strided_slice %24 {offsets = [0, 128], sizes = [8, 128], strides = [1, 1]} : vector<8x384xf32> to vector<8x128xf32>
    %37 = vector.extract_strided_slice %27 {offsets = [0, 128], sizes = [8, 128], strides = [1, 1]} : vector<8x384xf32> to vector<8x128xf32>
    %38 = arith.addf %36, %37 : vector<8x128xf32>
    %39 = arith.negf %38 : vector<8x128xf32>
    %40 = math.exp %39 : vector<8x128xf32>
    %cst_20 = arith.constant 1.000000e+00 : f32
    %41 = vector.broadcast %cst_20 : f32 to vector<8x128xf32>
    %42 = arith.addf %41, %40 : vector<8x128xf32>
    %43 = arith.divf %41, %42 : vector<8x128xf32>
    %44 = vector.extract_strided_slice %24 {offsets = [0, 256], sizes = [8, 128], strides = [1, 1]} : vector<8x384xf32> to vector<8x128xf32>
    %45 = vector.extract_strided_slice %27 {offsets = [0, 256], sizes = [8, 128], strides = [1, 1]} : vector<8x384xf32> to vector<8x128xf32>
    %46 = arith.mulf %35, %45 : vector<8x128xf32>
    %47 = arith.addf %44, %46 : vector<8x128xf32>
    %48 = math.tanh %47 : vector<8x128xf32>
    %49 = arith.addf %15, %20 : vector<8x128xf32>
    %cst_21 = arith.constant 5.000000e-01 : f32
    %50 = vector.broadcast %cst_21 : f32 to vector<8x128xf32>
    %51 = arith.mulf %50, %49 : vector<8x128xf32>
    %52 = arith.subf %51, %48 : vector<8x128xf32>
    %53 = arith.mulf %43, %52 : vector<8x128xf32>
    %54 = arith.addf %48, %53 : vector<8x128xf32>
    %c1_i32 = arith.constant 1 : i32
    %55 = arith.addi %c0_i32, %c1_i32 : i32
    %56 = arith.index_cast %55 : i32 to index
    %c0_22 = arith.constant 0 : index
    %c0_23 = arith.constant 0 : index
    %57 = vector.load %arg13[%56, %c0_22, %c0_23] : memref<5x8x128xf32, #tpu.memory_space<vmem>>, vector<1x8x128xf32>
    %58 = vector.shape_cast %57 : vector<1x8x128xf32> to vector<8x128xf32>
    %59 = vector.shape_cast %54 : vector<8x128xf32> to vector<1x8x128xf32>
    tpu.vector_store %arg13[%56, %c0_22, %c0_23], %59 {strides = array<i32>} : memref<5x8x128xf32, #tpu.memory_space<vmem>>, vector<1x8x128xf32>,
    %c1_i32_24 = arith.constant 1 : i32
    %60 = arith.index_cast %c1_i32_24 : i32 to index
    %c0_25 = arith.constant 0 : index
    %c0_26 = arith.constant 0 : index
    %61 = vector.load %arg2[%60, %c0_25, %c0_26] : memref<4x8x128xf32, #tpu.memory_space<vmem>>, vector<1x8x128xf32>
    %62 = vector.shape_cast %61 : vector<1x8x128xf32> to vector<8x128xf32>
    %c0_27 = arith.constant 0 : index
    %63 = arith.index_cast %c1_i32_24 : i32 to index
    %64 = memref.load %arg1[%c0_27, %63] : memref<2x4xi32, #tpu.memory_space<smem>>
    %65 = arith.index_cast %64 : i32 to index
    %c0_28 = arith.constant 0 : index
    %c0_29 = arith.constant 0 : index
    %66 = vector.load %arg13[%65, %c0_28, %c0_29] : memref<5x8x128xf32, #tpu.memory_space<vmem>>, vector<1x8x128xf32>
    %67 = vector.shape_cast %66 : vector<1x8x128xf32> to vector<8x128xf32>
    %c1_30 = arith.constant 1 : index
    %68 = arith.index_cast %c1_i32_24 : i32 to index
    %69 = memref.load %arg1[%c1_30, %68] : memref<2x4xi32, #tpu.memory_space<smem>>
    %70 = arith.index_cast %69 : i32 to index
    %c0_31 = arith.constant 0 : index
    %c0_32 = arith.constant 0 : index
    %71 = vector.load %arg13[%70, %c0_31, %c0_32] : memref<5x8x128xf32, #tpu.memory_space<vmem>>, vector<1x8x128xf32>
    %72 = vector.shape_cast %71 : vector<1x8x128xf32> to vector<8x128xf32>
    %73 = tpu.concatenate %67, %72 in 1 : vector<8x128xf32>, vector<8x128xf32> -> vector<8x256xf32>
    %cst_33 = arith.constant dense<0.000000e+00> : vector<8x384xf32>
    %74 = tpu.matmul %62, %4, %cst_33 {dimension_numbers = #tpu.dot_dimension_numbers<[1], [0], [0], [1], [0, 0, 1, 1], [], []>} : vector<8x128xf32>, vector<128x384xf32>, vector<8x384xf32> -> vector<8x384xf32>
    %75 = vector.broadcast %5 : vector<1x384xf32> to vector<8x384xf32>
    %76 = arith.addf %74, %75 : vector<8x384xf32>
    %cst_34 = arith.constant dense<0.000000e+00> : vector<8x384xf32>
    %77 = tpu.matmul %73, %6, %cst_34 {dimension_numbers = #tpu.dot_dimension_numbers<[1], [0], [0], [1], [0, 0, 1, 1], [], []>} : vector<8x256xf32>, vector<256x384xf32>, vector<8x384xf32> -> vector<8x384xf32>
    %78 = vector.broadcast %7 : vector<1x384xf32> to vector<8x384xf32>
    %79 = arith.addf %77, %78 : vector<8x384xf32>
    %80 = vector.extract_strided_slice %76 {offsets = [0, 0], sizes = [8, 128], strides = [1, 1]} : vector<8x384xf32> to vector<8x128xf32>
    %81 = vector.extract_strided_slice %79 {offsets = [0, 0], sizes = [8, 128], strides = [1, 1]} : vector<8x384xf32> to vector<8x128xf32>
    %82 = arith.addf %80, %81 : vector<8x128xf32>
    %83 = arith.negf %82 : vector<8x128xf32>
    %84 = math.exp %83 : vector<8x128xf32>
    %cst_35 = arith.constant 1.000000e+00 : f32
    %85 = vector.broadcast %cst_35 : f32 to vector<8x128xf32>
    %86 = arith.addf %85, %84 : vector<8x128xf32>
    %87 = arith.divf %85, %86 : vector<8x128xf32>
    %88 = vector.extract_strided_slice %76 {offsets = [0, 128], sizes = [8, 128], strides = [1, 1]} : vector<8x384xf32> to vector<8x128xf32>
    %89 = vector.extract_strided_slice %79 {offsets = [0, 128], sizes = [8, 128], strides = [1, 1]} : vector<8x384xf32> to vector<8x128xf32>
    %90 = arith.addf %88, %89 : vector<8x128xf32>
    %91 = arith.negf %90 : vector<8x128xf32>
    %92 = math.exp %91 : vector<8x128xf32>
    %cst_36 = arith.constant 1.000000e+00 : f32
    %93 = vector.broadcast %cst_36 : f32 to vector<8x128xf32>
    %94 = arith.addf %93, %92 : vector<8x128xf32>
    %95 = arith.divf %93, %94 : vector<8x128xf32>
    %96 = vector.extract_strided_slice %76 {offsets = [0, 256], sizes = [8, 128], strides = [1, 1]} : vector<8x384xf32> to vector<8x128xf32>
    %97 = vector.extract_strided_slice %79 {offsets = [0, 256], sizes = [8, 128], strides = [1, 1]} : vector<8x384xf32> to vector<8x128xf32>
    %98 = arith.mulf %87, %97 : vector<8x128xf32>
    %99 = arith.addf %96, %98 : vector<8x128xf32>
    %100 = math.tanh %99 : vector<8x128xf32>
    %101 = arith.addf %67, %72 : vector<8x128xf32>
    %cst_37 = arith.constant 5.000000e-01 : f32
    %102 = vector.broadcast %cst_37 : f32 to vector<8x128xf32>
    %103 = arith.mulf %102, %101 : vector<8x128xf32>
    %104 = arith.subf %103, %100 : vector<8x128xf32>
    %105 = arith.mulf %95, %104 : vector<8x128xf32>
    %106 = arith.addf %100, %105 : vector<8x128xf32>
    %c1_i32_38 = arith.constant 1 : i32
    %107 = arith.addi %c1_i32_24, %c1_i32_38 : i32
    %108 = arith.index_cast %107 : i32 to index
    %c0_39 = arith.constant 0 : index
    %c0_40 = arith.constant 0 : index
    %109 = vector.load %arg13[%108, %c0_39, %c0_40] : memref<5x8x128xf32, #tpu.memory_space<vmem>>, vector<1x8x128xf32>
    %110 = vector.shape_cast %109 : vector<1x8x128xf32> to vector<8x128xf32>
    %111 = vector.shape_cast %106 : vector<8x128xf32> to vector<1x8x128xf32>
    tpu.vector_store %arg13[%108, %c0_39, %c0_40], %111 {strides = array<i32>} : memref<5x8x128xf32, #tpu.memory_space<vmem>>, vector<1x8x128xf32>,
    %c2_i32 = arith.constant 2 : i32
    %112 = arith.index_cast %c2_i32 : i32 to index
    %c0_41 = arith.constant 0 : index
    %c0_42 = arith.constant 0 : index
    %113 = vector.load %arg2[%112, %c0_41, %c0_42] : memref<4x8x128xf32, #tpu.memory_space<vmem>>, vector<1x8x128xf32>
    %114 = vector.shape_cast %113 : vector<1x8x128xf32> to vector<8x128xf32>
    %c0_43 = arith.constant 0 : index
    %115 = arith.index_cast %c2_i32 : i32 to index
    %116 = memref.load %arg1[%c0_43, %115] : memref<2x4xi32, #tpu.memory_space<smem>>
    %117 = arith.index_cast %116 : i32 to index
    %c0_44 = arith.constant 0 : index
    %c0_45 = arith.constant 0 : index
    %118 = vector.load %arg13[%117, %c0_44, %c0_45] : memref<5x8x128xf32, #tpu.memory_space<vmem>>, vector<1x8x128xf32>
    %119 = vector.shape_cast %118 : vector<1x8x128xf32> to vector<8x128xf32>
    %c1_46 = arith.constant 1 : index
    %120 = arith.index_cast %c2_i32 : i32 to index
    %121 = memref.load %arg1[%c1_46, %120] : memref<2x4xi32, #tpu.memory_space<smem>>
    %122 = arith.index_cast %121 : i32 to index
    %c0_47 = arith.constant 0 : index
    %c0_48 = arith.constant 0 : index
    %123 = vector.load %arg13[%122, %c0_47, %c0_48] : memref<5x8x128xf32, #tpu.memory_space<vmem>>, vector<1x8x128xf32>
    %124 = vector.shape_cast %123 : vector<1x8x128xf32> to vector<8x128xf32>
    %125 = tpu.concatenate %119, %124 in 1 : vector<8x128xf32>, vector<8x128xf32> -> vector<8x256xf32>
    %cst_49 = arith.constant dense<0.000000e+00> : vector<8x384xf32>
    %126 = tpu.matmul %114, %4, %cst_49 {dimension_numbers = #tpu.dot_dimension_numbers<[1], [0], [0], [1], [0, 0, 1, 1], [], []>} : vector<8x128xf32>, vector<128x384xf32>, vector<8x384xf32> -> vector<8x384xf32>
    %127 = vector.broadcast %5 : vector<1x384xf32> to vector<8x384xf32>
    %128 = arith.addf %126, %127 : vector<8x384xf32>
    %cst_50 = arith.constant dense<0.000000e+00> : vector<8x384xf32>
    %129 = tpu.matmul %125, %6, %cst_50 {dimension_numbers = #tpu.dot_dimension_numbers<[1], [0], [0], [1], [0, 0, 1, 1], [], []>} : vector<8x256xf32>, vector<256x384xf32>, vector<8x384xf32> -> vector<8x384xf32>
    %130 = vector.broadcast %7 : vector<1x384xf32> to vector<8x384xf32>
    %131 = arith.addf %129, %130 : vector<8x384xf32>
    %132 = vector.extract_strided_slice %128 {offsets = [0, 0], sizes = [8, 128], strides = [1, 1]} : vector<8x384xf32> to vector<8x128xf32>
    %133 = vector.extract_strided_slice %131 {offsets = [0, 0], sizes = [8, 128], strides = [1, 1]} : vector<8x384xf32> to vector<8x128xf32>
    %134 = arith.addf %132, %133 : vector<8x128xf32>
    %135 = arith.negf %134 : vector<8x128xf32>
    %136 = math.exp %135 : vector<8x128xf32>
    %cst_51 = arith.constant 1.000000e+00 : f32
    %137 = vector.broadcast %cst_51 : f32 to vector<8x128xf32>
    %138 = arith.addf %137, %136 : vector<8x128xf32>
    %139 = arith.divf %137, %138 : vector<8x128xf32>
    %140 = vector.extract_strided_slice %128 {offsets = [0, 128], sizes = [8, 128], strides = [1, 1]} : vector<8x384xf32> to vector<8x128xf32>
    %141 = vector.extract_strided_slice %131 {offsets = [0, 128], sizes = [8, 128], strides = [1, 1]} : vector<8x384xf32> to vector<8x128xf32>
    %142 = arith.addf %140, %141 : vector<8x128xf32>
    %143 = arith.negf %142 : vector<8x128xf32>
    %144 = math.exp %143 : vector<8x128xf32>
    %cst_52 = arith.constant 1.000000e+00 : f32
    %145 = vector.broadcast %cst_52 : f32 to vector<8x128xf32>
    %146 = arith.addf %145, %144 : vector<8x128xf32>
    %147 = arith.divf %145, %146 : vector<8x128xf32>
    %148 = vector.extract_strided_slice %128 {offsets = [0, 256], sizes = [8, 128], strides = [1, 1]} : vector<8x384xf32> to vector<8x128xf32>
    %149 = vector.extract_strided_slice %131 {offsets = [0, 256], sizes = [8, 128], strides = [1, 1]} : vector<8x384xf32> to vector<8x128xf32>
    %150 = arith.mulf %139, %149 : vector<8x128xf32>
    %151 = arith.addf %148, %150 : vector<8x128xf32>
    %152 = math.tanh %151 : vector<8x128xf32>
    %153 = arith.addf %119, %124 : vector<8x128xf32>
    %cst_53 = arith.constant 5.000000e-01 : f32
    %154 = vector.broadcast %cst_53 : f32 to vector<8x128xf32>
    %155 = arith.mulf %154, %153 : vector<8x128xf32>
    %156 = arith.subf %155, %152 : vector<8x128xf32>
    %157 = arith.mulf %147, %156 : vector<8x128xf32>
    %158 = arith.addf %152, %157 : vector<8x128xf32>
    %c1_i32_54 = arith.constant 1 : i32
    %159 = arith.addi %c2_i32, %c1_i32_54 : i32
    %160 = arith.index_cast %159 : i32 to index
    %c0_55 = arith.constant 0 : index
    %c0_56 = arith.constant 0 : index
    %161 = vector.load %arg13[%160, %c0_55, %c0_56] : memref<5x8x128xf32, #tpu.memory_space<vmem>>, vector<1x8x128xf32>
    %162 = vector.shape_cast %161 : vector<1x8x128xf32> to vector<8x128xf32>
    %163 = vector.shape_cast %158 : vector<8x128xf32> to vector<1x8x128xf32>
    tpu.vector_store %arg13[%160, %c0_55, %c0_56], %163 {strides = array<i32>} : memref<5x8x128xf32, #tpu.memory_space<vmem>>, vector<1x8x128xf32>,
    %c3_i32 = arith.constant 3 : i32
    %164 = arith.index_cast %c3_i32 : i32 to index
    %c0_57 = arith.constant 0 : index
    %c0_58 = arith.constant 0 : index
    %165 = vector.load %arg2[%164, %c0_57, %c0_58] : memref<4x8x128xf32, #tpu.memory_space<vmem>>, vector<1x8x128xf32>
    %166 = vector.shape_cast %165 : vector<1x8x128xf32> to vector<8x128xf32>
    %c0_59 = arith.constant 0 : index
    %167 = arith.index_cast %c3_i32 : i32 to index
    %168 = memref.load %arg1[%c0_59, %167] : memref<2x4xi32, #tpu.memory_space<smem>>
    %169 = arith.index_cast %168 : i32 to index
    %c0_60 = arith.constant 0 : index
    %c0_61 = arith.constant 0 : index
    %170 = vector.load %arg13[%169, %c0_60, %c0_61] : memref<5x8x128xf32, #tpu.memory_space<vmem>>, vector<1x8x128xf32>
    %171 = vector.shape_cast %170 : vector<1x8x128xf32> to vector<8x128xf32>
    %c1_62 = arith.constant 1 : index
    %172 = arith.index_cast %c3_i32 : i32 to index
    %173 = memref.load %arg1[%c1_62, %172] : memref<2x4xi32, #tpu.memory_space<smem>>
    %174 = arith.index_cast %173 : i32 to index
    %c0_63 = arith.constant 0 : index
    %c0_64 = arith.constant 0 : index
    %175 = vector.load %arg13[%174, %c0_63, %c0_64] : memref<5x8x128xf32, #tpu.memory_space<vmem>>, vector<1x8x128xf32>
    %176 = vector.shape_cast %175 : vector<1x8x128xf32> to vector<8x128xf32>
    %177 = tpu.concatenate %171, %176 in 1 : vector<8x128xf32>, vector<8x128xf32> -> vector<8x256xf32>
    %cst_65 = arith.constant dense<0.000000e+00> : vector<8x384xf32>
    %178 = tpu.matmul %166, %4, %cst_65 {dimension_numbers = #tpu.dot_dimension_numbers<[1], [0], [0], [1], [0, 0, 1, 1], [], []>} : vector<8x128xf32>, vector<128x384xf32>, vector<8x384xf32> -> vector<8x384xf32>
    %179 = vector.broadcast %5 : vector<1x384xf32> to vector<8x384xf32>
    %180 = arith.addf %178, %179 : vector<8x384xf32>
    %cst_66 = arith.constant dense<0.000000e+00> : vector<8x384xf32>
    %181 = tpu.matmul %177, %6, %cst_66 {dimension_numbers = #tpu.dot_dimension_numbers<[1], [0], [0], [1], [0, 0, 1, 1], [], []>} : vector<8x256xf32>, vector<256x384xf32>, vector<8x384xf32> -> vector<8x384xf32>
    %182 = vector.broadcast %7 : vector<1x384xf32> to vector<8x384xf32>
    %183 = arith.addf %181, %182 : vector<8x384xf32>
    %184 = vector.extract_strided_slice %180 {offsets = [0, 0], sizes = [8, 128], strides = [1, 1]} : vector<8x384xf32> to vector<8x128xf32>
    %185 = vector.extract_strided_slice %183 {offsets = [0, 0], sizes = [8, 128], strides = [1, 1]} : vector<8x384xf32> to vector<8x128xf32>
    %186 = arith.addf %184, %185 : vector<8x128xf32>
    %187 = arith.negf %186 : vector<8x128xf32>
    %188 = math.exp %187 : vector<8x128xf32>
    %cst_67 = arith.constant 1.000000e+00 : f32
    %189 = vector.broadcast %cst_67 : f32 to vector<8x128xf32>
    %190 = arith.addf %189, %188 : vector<8x128xf32>
    %191 = arith.divf %189, %190 : vector<8x128xf32>
    %192 = vector.extract_strided_slice %180 {offsets = [0, 128], sizes = [8, 128], strides = [1, 1]} : vector<8x384xf32> to vector<8x128xf32>
    %193 = vector.extract_strided_slice %183 {offsets = [0, 128], sizes = [8, 128], strides = [1, 1]} : vector<8x384xf32> to vector<8x128xf32>
    %194 = arith.addf %192, %193 : vector<8x128xf32>
    %195 = arith.negf %194 : vector<8x128xf32>
    %196 = math.exp %195 : vector<8x128xf32>
    %cst_68 = arith.constant 1.000000e+00 : f32
    %197 = vector.broadcast %cst_68 : f32 to vector<8x128xf32>
    %198 = arith.addf %197, %196 : vector<8x128xf32>
    %199 = arith.divf %197, %198 : vector<8x128xf32>
    %200 = vector.extract_strided_slice %180 {offsets = [0, 256], sizes = [8, 128], strides = [1, 1]} : vector<8x384xf32> to vector<8x128xf32>
    %201 = vector.extract_strided_slice %183 {offsets = [0, 256], sizes = [8, 128], strides = [1, 1]} : vector<8x384xf32> to vector<8x128xf32>
    %202 = arith.mulf %191, %201 : vector<8x128xf32>
    %203 = arith.addf %200, %202 : vector<8x128xf32>
    %204 = math.tanh %203 : vector<8x128xf32>
    %205 = arith.addf %171, %176 : vector<8x128xf32>
    %cst_69 = arith.constant 5.000000e-01 : f32
    %206 = vector.broadcast %cst_69 : f32 to vector<8x128xf32>
    %207 = arith.mulf %206, %205 : vector<8x128xf32>
    %208 = arith.subf %207, %204 : vector<8x128xf32>
    %209 = arith.mulf %199, %208 : vector<8x128xf32>
    %210 = arith.addf %204, %209 : vector<8x128xf32>
    %c1_i32_70 = arith.constant 1 : i32
    %211 = arith.addi %c3_i32, %c1_i32_70 : i32
    %212 = arith.index_cast %211 : i32 to index
    %c0_71 = arith.constant 0 : index
    %c0_72 = arith.constant 0 : index
    %213 = vector.load %arg13[%212, %c0_71, %c0_72] : memref<5x8x128xf32, #tpu.memory_space<vmem>>, vector<1x8x128xf32>
    %214 = vector.shape_cast %213 : vector<1x8x128xf32> to vector<8x128xf32>
    %215 = vector.shape_cast %210 : vector<8x128xf32> to vector<1x8x128xf32>
    tpu.vector_store %arg13[%212, %c0_71, %c0_72], %215 {strides = array<i32>} : memref<5x8x128xf32, #tpu.memory_space<vmem>>, vector<1x8x128xf32>,
    %c4_i32 = arith.constant 4 : i32
    %c4 = arith.constant 4 : index
    %c0_73 = arith.constant 0 : index
    %c0_74 = arith.constant 0 : index
    %216 = vector.load %arg13[%c4, %c0_73, %c0_74] : memref<5x8x128xf32, #tpu.memory_space<vmem>>, vector<1x8x128xf32>
    %217 = vector.shape_cast %216 : vector<1x8x128xf32> to vector<8x128xf32>
    %c0_75 = arith.constant 0 : index
    %c0_76 = arith.constant 0 : index
    %218 = vector.load %arg7[%c0_75, %c0_76] : memref<128x256xf32, #tpu.memory_space<vmem>>, vector<128x256xf32>
    %cst_77 = arith.constant dense<0.000000e+00> : vector<8x256xf32>
    %219 = tpu.matmul %217, %218, %cst_77 {dimension_numbers = #tpu.dot_dimension_numbers<[1], [0], [0], [1], [0, 0, 1, 1], [], []>} : vector<8x128xf32>, vector<128x256xf32>, vector<8x256xf32> -> vector<8x256xf32>
    %c0_78 = arith.constant 0 : index
    %c0_79 = arith.constant 0 : index
    %220 = vector.load %arg8[%c0_78, %c0_79] : memref<1x256xf32, #tpu.memory_space<vmem>>, vector<1x256xf32>
    %221 = vector.broadcast %220 : vector<1x256xf32> to vector<8x256xf32>
    %222 = arith.addf %219, %221 : vector<8x256xf32>
    %223 = vector.extract_strided_slice %222 {offsets = [0, 0], sizes = [8, 128], strides = [1, 1]} : vector<8x256xf32> to vector<8x128xf32>
    %224 = vector.extract_strided_slice %222 {offsets = [0, 128], sizes = [8, 128], strides = [1, 1]} : vector<8x256xf32> to vector<8x128xf32>
    %c0_80 = arith.constant 0 : index
    %c0_81 = arith.constant 0 : index
    %225 = vector.load %arg10[%c0_80, %c0_81] : memref<8x128xf32, #tpu.memory_space<vmem>>, vector<8x128xf32>
    tpu.vector_store %arg10[%c0_80, %c0_81], %223 {strides = array<i32>} : memref<8x128xf32, #tpu.memory_space<vmem>>, vector<8x128xf32>,
    %c0_82 = arith.constant 0 : index
    %c0_83 = arith.constant 0 : index
    %226 = vector.load %arg11[%c0_82, %c0_83] : memref<8x128xf32, #tpu.memory_space<vmem>>, vector<8x128xf32>
    tpu.vector_store %arg11[%c0_82, %c0_83], %224 {strides = array<i32>} : memref<8x128xf32, #tpu.memory_space<vmem>>, vector<8x128xf32>,
    %c0_84 = arith.constant 0 : index
    %c0_85 = arith.constant 0 : index
    %227 = vector.load %arg9[%c0_84, %c0_85] : memref<8x128xf32, #tpu.memory_space<vmem>>, vector<8x128xf32>
    %cst_86 = arith.constant 5.000000e-01 : f32
    %228 = vector.broadcast %cst_86 : f32 to vector<8x128xf32>
    %229 = arith.mulf %228, %224 : vector<8x128xf32>
    %230 = math.exp %229 : vector<8x128xf32>
    %231 = arith.mulf %227, %230 : vector<8x128xf32>
    %232 = arith.addf %223, %231 : vector<8x128xf32>
    %c0_87 = arith.constant 0 : index
    %c0_88 = arith.constant 0 : index
    %233 = vector.load %arg12[%c0_87, %c0_88] : memref<8x128xf32, #tpu.memory_space<vmem>>, vector<8x128xf32>
    tpu.vector_store %arg12[%c0_87, %c0_88], %232 {strides = array<i32>} : memref<8x128xf32, #tpu.memory_space<vmem>>, vector<8x128xf32>,
    return
  }
  func.func @transform_0(%arg0: i32, %arg1: memref<2x4xi32, #tpu.memory_space<smem>>) -> (i32, i32, i32) {
    %c0_i32 = arith.constant 0 : i32
    %c0_i32_0 = arith.constant 0 : i32
    %c0_i32_1 = arith.constant 0 : i32
    %c0_i32_2 = arith.constant 0 : i32
    return %c0_i32, %c0_i32_0, %c0_i32_1 : i32, i32, i32
  }
  func.func @transform_1(%arg0: i32, %arg1: memref<2x4xi32, #tpu.memory_space<smem>>) -> (i32, i32) {
    %c0_i32 = arith.constant 0 : i32
    %c0_i32_0 = arith.constant 0 : i32
    %c0_i32_1 = arith.constant 0 : i32
    return %c0_i32, %c0_i32_0 : i32, i32
  }
  func.func @transform_2(%arg0: i32, %arg1: memref<2x4xi32, #tpu.memory_space<smem>>) -> (i32, i32) {
    %c0_i32 = arith.constant 0 : i32
    %c0_i32_0 = arith.constant 0 : i32
    %c0_i32_1 = arith.constant 0 : i32
    return %c0_i32, %c0_i32_0 : i32, i32
  }
  func.func @transform_3(%arg0: i32, %arg1: memref<2x4xi32, #tpu.memory_space<smem>>) -> (i32, i32) {
    %c0_i32 = arith.constant 0 : i32
    %c0_i32_0 = arith.constant 0 : i32
    %c0_i32_1 = arith.constant 0 : i32
    return %c0_i32, %c0_i32_0 : i32, i32
  }
  func.func @transform_4(%arg0: i32, %arg1: memref<2x4xi32, #tpu.memory_space<smem>>) -> (i32, i32) {
    %c0_i32 = arith.constant 0 : i32
    %c0_i32_0 = arith.constant 0 : i32
    %c0_i32_1 = arith.constant 0 : i32
    return %c0_i32, %c0_i32_0 : i32, i32
  }
  func.func @transform_5(%arg0: i32, %arg1: memref<2x4xi32, #tpu.memory_space<smem>>) -> (i32, i32) {
    %c0_i32 = arith.constant 0 : i32
    %c0_i32_0 = arith.constant 0 : i32
    %c0_i32_1 = arith.constant 0 : i32
    return %c0_i32, %c0_i32_0 : i32, i32
  }
  func.func @transform_6(%arg0: i32, %arg1: memref<2x4xi32, #tpu.memory_space<smem>>) -> (i32, i32) {
    %c0_i32 = arith.constant 0 : i32
    %c0_i32_0 = arith.constant 0 : i32
    %c0_i32_1 = arith.constant 0 : i32
    return %c0_i32, %c0_i32_0 : i32, i32
  }
  func.func @transform_7(%arg0: i32, %arg1: memref<2x4xi32, #tpu.memory_space<smem>>) -> (i32, i32) {
    %c0_i32 = arith.constant 0 : i32
    %c0_i32_0 = arith.constant 0 : i32
    %c0_i32_1 = arith.constant 0 : i32
    return %c0_i32, %c0_i32_0 : i32, i32
  }
  func.func @transform_8(%arg0: i32, %arg1: memref<2x4xi32, #tpu.memory_space<smem>>) -> (i32, i32) {
    %c0_i32 = arith.constant 0 : i32
    %c0_i32_0 = arith.constant 0 : i32
    %c0_i32_1 = arith.constant 0 : i32
    return %c0_i32, %c0_i32_0 : i32, i32
  }
  func.func @transform_9(%arg0: i32, %arg1: memref<2x4xi32, #tpu.memory_space<smem>>) -> (i32, i32) {
    %c0_i32 = arith.constant 0 : i32
    %c0_i32_0 = arith.constant 0 : i32
    %c0_i32_1 = arith.constant 0 : i32
    return %c0_i32, %c0_i32_0 : i32, i32
  }
  func.func @transform_10(%arg0: i32, %arg1: memref<2x4xi32, #tpu.memory_space<smem>>) -> (i32, i32) {
    %c0_i32 = arith.constant 0 : i32
    %c0_i32_0 = arith.constant 0 : i32
    %c0_i32_1 = arith.constant 0 : i32
    return %c0_i32, %c0_i32_0 : i32, i32
  }
}

</mosaic_0001>

<llo_original>
// kernel: _encoder_pallas.1
$region0: #{_encoder_pallas.1}
  #allocation0 [shape = 'u32[]', space=smem, size = 0x4, offset = 0x4, fixed_abs, tag = 'smem constant byte address 0x4 - core index']
  #allocation1 [shape = 'u32[144,128]{1,0:T(1,128)}', space=vmem, size = 0x12000, scoped, tag = 'internal scratch']
  #allocation2 [shape = 'f32[5,8,128]{2,1,0:T(8,128)}', space=vmem, size = 0x5000, scoped, tag = 'scratch operand']
  #allocation3 [shape = 's32[1]{0}', space=sflag, size = 0x4, scoped, tag = 'scoped memory for _encoder_pallas.1']
  #allocation4 [shape = 'u8[1024]{0}', space=smem, size = 0x400, scoped, tag = 'prefetched SMEM operand 0']
  %s0 = inlined_call_operand.hbm [shape: s32[2,4], index: 0, kind: input, shape index: {}]
  %s1 = inlined_call_operand.hbm [shape: f32[4,8,128], index: 1, kind: input, shape index: {}]
  %s2 = inlined_call_operand.hbm [shape: f32[128,384], index: 2, kind: input, shape index: {}]
  %s3 = inlined_call_operand.vmem [shape: f32[1,384], index: 3, kind: input, shape index: {}]
  %s4 = inlined_call_operand.hbm [shape: f32[256,384], index: 4, kind: input, shape index: {}]
  %s5 = inlined_call_operand.vmem [shape: f32[1,384], index: 5, kind: input, shape index: {}]
  %s6 = inlined_call_operand.hbm [shape: f32[128,256], index: 6, kind: input, shape index: {}]
  %s7 = inlined_call_operand.hbm [shape: f32[1,256], index: 7, kind: input, shape index: {}]
  %s8 = inlined_call_operand.vmem [shape: f32[8,128], index: 8, kind: input, shape index: {}]
  %s9 = inlined_call_operand.hbm [shape: f32[8,128], index: 9, kind: output, shape index: {0}]
  %s10 = inlined_call_operand.hbm [shape: f32[8,128], index: 10, kind: output, shape index: {1}]
  %s11 = inlined_call_operand.hbm [shape: f32[8,128], index: 11, kind: output, shape index: {2}]
  %12 = xla_tuple %s9, %s10, %s11
  %s13 = sld [smem:[#allocation0]]
  $region78: #{_encoder_pallas.1} parent=0
    _
  %s15 = ssub.s32 1, %s13
  %s16 = scalar_select 0, %s15, %s13
  %18 = dma.hbm_to_smem %s0, 32, [#allocation4], [#allocation3]
  %19 = dma.done [#allocation3], 32
  %20 = sfence
  $region1: #{_encoder_pallas.1} parent=0
    #allocation5 [shape = 'u8[16384]{0}', space=vmem, size = 0x4000, scoped, tag = 'input window, operand 1, single buffered']
    #allocation6 [shape = 's32[1]{0}', space=sflag, size = 0x4, scoped, tag = 'scoped memory for _encoder_pallas.1']
    #allocation7 [shape = 's32[1]{0}', space=sflag, size = 0x4, scoped, tag = 'scoped memory for _encoder_pallas.1']
    #allocation8 [shape = 'u8[196608]{0}', space=vmem, size = 0x30000, scoped, tag = 'input window, operand 2, single buffered']
    #allocation9 [shape = 's32[1]{0}', space=sflag, size = 0x4, scoped, tag = 'scoped memory for _encoder_pallas.1']
    #allocation10 [shape = 'u8[393216]{0}', space=vmem, size = 0x60000, scoped, tag = 'input window, operand 4, single buffered']
    #allocation11 [shape = 'u8[131072]{0}', space=vmem, size = 0x20000, scoped, tag = 'input window, operand 6, single buffered']
    #allocation12 [shape = 's32[1]{0}', space=sflag, size = 0x4, scoped, tag = 'scoped memory for _encoder_pallas.1']
    #allocation13 [shape = 'u8[1024]{0}', space=vmem, size = 0x400, scoped, tag = 'input window, operand 7, single buffered']
    #allocation14 [shape = 'u8[4096]{0}', space=vmem, size = 0x1000, scoped, tag = 'output window, operand 0, single buffered']
    #allocation15 [shape = 'u8[4096]{0}', space=vmem, size = 0x1000, scoped, tag = 'output window, operand 1, single buffered']
    #allocation16 [shape = 's32[1]{0}', space=sflag, size = 0x4, scoped, tag = 'scoped memory for _encoder_pallas.1']
    #allocation17 [shape = 'u8[4096]{0}', space=vmem, size = 0x1000, scoped, tag = 'output window, operand 2, single buffered']
    %21 = vsyncpa [#allocation6], 0
    %22 = vsyncpa [#allocation9], 0
    %23 = vsyncpa [#allocation12], 0
    %24 = vsyncpa [#allocation7], 0
    %25 = vsyncpa [#allocation16], 0
    // Predicated region
    $region2: #{_encoder_pallas.1} parent=1 // pred_check
      _
    $region3: #{_encoder_pallas.1} parent=1 // pred_check_branch
      %27 = sbr.rel (0) target = $region5
    $region4: #{_encoder_pallas.1} parent=1 // pred_region
      %s29 = ssub.s32 512, 512
      %30 = vsyncadd [#allocation6], %s29
      %s31 = sshll.u32 [#allocation5], 4
      %s32 = int_to_ptr.vmem [resolvable:$true] %s31
      %37 = dma.hbm_to_vmem [thread:$0]  %s1, 512, %s32, [#allocation6], 128, 128, 8
    $region5: #{_encoder_pallas.1} parent=1 // pred_fallthru
      _
    // Predicated region
    $region6: #{_encoder_pallas.1} parent=1 // pred_check
      _
    $region7: #{_encoder_pallas.1} parent=1 // pred_check_branch
      %39 = sbr.rel (0) target = $region9
    $region8: #{_encoder_pallas.1} parent=1 // pred_region
      %s41 = ssub.s32 6144, 6144
      %42 = vsyncadd [#allocation9], %s41
      %s43 = sshll.u32 [#allocation8], 4
      %s44 = int_to_ptr.vmem [resolvable:$true] %s43
      %49 = dma.hbm_to_vmem [thread:$0]  %s2, 6144, %s44, [#allocation9], 384, 384, 24
    $region9: #{_encoder_pallas.1} parent=1 // pred_fallthru
      _
    // Predicated region
    $region10: #{_encoder_pallas.1} parent=1 // pred_check
      _
    $region11: #{_encoder_pallas.1} parent=1 // pred_check_branch
      %51 = sbr.rel (0) target = $region13
    $region12: #{_encoder_pallas.1} parent=1 // pred_region
      _
    $region13: #{_encoder_pallas.1} parent=1 // pred_fallthru
      _
    // Predicated region
    $region14: #{_encoder_pallas.1} parent=1 // pred_check
      _
    $region15: #{_encoder_pallas.1} parent=1 // pred_check_branch
      %53 = sbr.rel (0) target = $region17
    $region16: #{_encoder_pallas.1} parent=1 // pred_region
      %s55 = ssub.s32 12288, 12288
      %56 = vsyncadd [#allocation9], %s55
      %s57 = sshll.u32 [#allocation10], 4
      %s58 = int_to_ptr.vmem [resolvable:$true] %s57
      %63 = dma.hbm_to_vmem [thread:$0]  %s4, 12288, %s58, [#allocation9], 384, 384, 24
    $region17: #{_encoder_pallas.1} parent=1 // pred_fallthru
      _
    // Predicated region
    $region18: #{_encoder_pallas.1} parent=1 // pred_check
      _
    $region19: #{_encoder_pallas.1} parent=1 // pred_check_branch
      %65 = sbr.rel (0) target = $region21
    $region20: #{_encoder_pallas.1} parent=1 // pred_region
      _
    $region21: #{_encoder_pallas.1} parent=1 // pred_fallthru
      _
    // Predicated region
    $region22: #{_encoder_pallas.1} parent=1 // pred_check
      _
    $region23: #{_encoder_pallas.1} parent=1 // pred_check_branch
      %67 = sbr.rel (0) target = $region25
    $region24: #{_encoder_pallas.1} parent=1 // pred_region
      %s69 = ssub.s32 4096, 4096
      %70 = vsyncadd [#allocation12], %s69
      %s71 = sshll.u32 [#allocation11], 4
      %s72 = int_to_ptr.vmem [resolvable:$true] %s71
      %77 = dma.hbm_to_vmem [thread:$0]  %s6, 4096, %s72, [#allocation12], 256, 256, 16
    $region25: #{_encoder_pallas.1} parent=1 // pred_fallthru
      _
    // Predicated region
    $region26: #{_encoder_pallas.1} parent=1 // pred_check
      _
    $region27: #{_encoder_pallas.1} parent=1 // pred_check_branch
      %79 = sbr.rel (0) target = $region29
    $region28: #{_encoder_pallas.1} parent=1 // pred_region
      %s81 = ssub.s32 32, 32
      %82 = vsyncadd [#allocation12], %s81
      %s84 = sshll.u32 [#allocation13], 4
      %s85 = int_to_ptr.vmem [resolvable:$true] %s84
      %87 = dma.hbm_to_vmem [thread:$0]  %s7, 32, %s85, [#allocation12]
    $region29: #{_encoder_pallas.1} parent=1 // pred_fallthru
      _
    // Predicated region
    $region30: #{_encoder_pallas.1} parent=1 // pred_check
      _
    $region31: #{_encoder_pallas.1} parent=1 // pred_check_branch
      %89 = sbr.rel (0) target = $region33
    $region32: #{_encoder_pallas.1} parent=1 // pred_region
      _
    $region33: #{_encoder_pallas.1} parent=1 // pred_fallthru
      _
    // Predicated region
    $region34: #{_encoder_pallas.1} parent=1 // pred_check
      _
    $region35: #{_encoder_pallas.1} parent=1 // pred_check_branch
      %91 = sbr.rel (0) target = $region37
    $region36: #{_encoder_pallas.1} parent=1 // pred_region
      %92 = dma.done [#allocation6], 512
    $region37: #{_encoder_pallas.1} parent=1 // pred_fallthru
      _
    // Predicated region
    $region38: #{_encoder_pallas.1} parent=1 // pred_check
      _
    $region39: #{_encoder_pallas.1} parent=1 // pred_check_branch
      %94 = sbr.rel (0) target = $region41
    $region40: #{_encoder_pallas.1} parent=1 // pred_region
      %95 = dma.done [#allocation9], 6144
    $region41: #{_encoder_pallas.1} parent=1 // pred_fallthru
      _
    // Predicated region
    $region42: #{_encoder_pallas.1} parent=1 // pred_check
      _
    $region43: #{_encoder_pallas.1} parent=1 // pred_check_branch
      %97 = sbr.rel (0) target = $region45
    $region44: #{_encoder_pallas.1} parent=1 // pred_region
      %98 = dma.done [#allocation9], 12288
    $region45: #{_encoder_pallas.1} parent=1 // pred_fallthru
      _
    // Predicated region
    $region46: #{_encoder_pallas.1} parent=1 // pred_check
      _
    $region47: #{_encoder_pallas.1} parent=1 // pred_check_branch
      %100 = sbr.rel (0) target = $region49
    $region48: #{_encoder_pallas.1} parent=1 // pred_region
      %101 = dma.done [#allocation12], 4096
    $region49: #{_encoder_pallas.1} parent=1 // pred_fallthru
      _
    // Predicated region
    $region50: #{_encoder_pallas.1} parent=1 // pred_check
      _
    $region51: #{_encoder_pallas.1} parent=1 // pred_check_branch
      %103 = sbr.rel (0) target = $region53
    $region52: #{_encoder_pallas.1} parent=1 // pred_region
      %104 = dma.done [#allocation12], 32
    $region53: #{_encoder_pallas.1} parent=1 // pred_fallthru
      _
    %105 = vst [vmem:[#allocation2] sm:$0xff] 0.0
    %v106 = vld [vmem:[#allocation8] sm:$0xff]
    %v107 = vld [vmem:[#allocation8 + $0x8] sm:$0xff]
    %v108 = vld [vmem:[#allocation8 + $0x10] sm:$0xff]
    %v109 = vld [vmem:[#allocation8 + $0x18] sm:$0xff]
    %v110 = vld [vmem:[#allocation8 + $0x20] sm:$0xff]
    %v111 = vld [vmem:[#allocation8 + $0x28] sm:$0xff]
    %v112 = vld [vmem:[#allocation8 + $0x30] sm:$0xff]
    %v113 = vld [vmem:[#allocation8 + $0x38] sm:$0xff]
    %v114 = vld [vmem:[#allocation8 + $0x40] sm:$0xff]
    %v115 = vld [vmem:[#allocation8 + $0x48] sm:$0xff]
    %v116 = vld [vmem:[#allocation8 + $0x50] sm:$0xff]
    %v117 = vld [vmem:[#allocation8 + $0x58] sm:$0xff]
    %v118 = vld [vmem:[#allocation8 + $0x60] sm:$0xff]
    %v119 = vld [vmem:[#allocation8 + $0x68] sm:$0xff]
    %v120 = vld [vmem:[#allocation8 + $0x70] sm:$0xff]
    %v121 = vld [vmem:[#allocation8 + $0x78] sm:$0xff]
    %v122 = vld [vmem:[#allocation8 + $0x80] sm:$0xff]
    %v123 = vld [vmem:[#allocation8 + $0x88] sm:$0xff]
    %v124 = vld [vmem:[#allocation8 + $0x90] sm:$0xff]
    %v125 = vld [vmem:[#allocation8 + $0x98] sm:$0xff]
    %v126 = vld [vmem:[#allocation8 + $0xa0] sm:$0xff]
    %v127 = vld [vmem:[#allocation8 + $0xa8] sm:$0xff]
    %v128 = vld [vmem:[#allocation8 + $0xb0] sm:$0xff]
    %v129 = vld [vmem:[#allocation8 + $0xb8] sm:$0xff]
    %v130 = vld [vmem:[#allocation8 + $0xc0] sm:$0xff]
    %v131 = vld [vmem:[#allocation8 + $0xc8] sm:$0xff]
    %v132 = vld [vmem:[#allocation8 + $0xd0] sm:$0xff]
    %v133 = vld [vmem:[#allocation8 + $0xd8] sm:$0xff]
    %v134 = vld [vmem:[#allocation8 + $0xe0] sm:$0xff]
    %v135 = vld [vmem:[#allocation8 + $0xe8] sm:$0xff]
    %v136 = vld [vmem:[#allocation8 + $0xf0] sm:$0xff]
    %v137 = vld [vmem:[#allocation8 + $0xf8] sm:$0xff]
    %v138 = vld [vmem:[#allocation8 + $0x100] sm:$0xff]
    %v139 = vld [vmem:[#allocation8 + $0x108] sm:$0xff]
    %v140 = vld [vmem:[#allocation8 + $0x110] sm:$0xff]
    %v141 = vld [vmem:[#allocation8 + $0x118] sm:$0xff]
    %v142 = vld [vmem:[#allocation8 + $0x120] sm:$0xff]
    %v143 = vld [vmem:[#allocation8 + $0x128] sm:$0xff]
    %v144 = vld [vmem:[#allocation8 + $0x130] sm:$0xff]
    %v145 = vld [vmem:[#allocation8 + $0x138] sm:$0xff]
    %v146 = vld [vmem:[#allocation8 + $0x140] sm:$0xff]
    %v147 = vld [vmem:[#allocation8 + $0x148] sm:$0xff]
    %v148 = vld [vmem:[#allocation8 + $0x150] sm:$0xff]
    %v149 = vld [vmem:[#allocation8 + $0x158] sm:$0xff]
    %v150 = vld [vmem:[#allocation8 + $0x160] sm:$0xff]
    %v151 = vld [vmem:[#allocation8 + $0x168] sm:$0xff]
    %v152 = vld [vmem:[#allocation8 + $0x170] sm:$0xff]
    %v153 = vld [vmem:[#allocation8 + $0x178] sm:$0xff]
    %v154 = vld [vmem:[%s3] sm:$0x7]
    %v155 = vld [vmem:[#allocation10] sm:$0xff]
    %v156 = vld [vmem:[#allocation10 + $0x8] sm:$0xff]
    %v157 = vld [vmem:[#allocation10 + $0x10] sm:$0xff]
    %v158 = vld [vmem:[#allocation10 + $0x18] sm:$0xff]
    %v159 = vld [vmem:[#allocation10 + $0x20] sm:$0xff]
    %v160 = vld [vmem:[#allocation10 + $0x28] sm:$0xff]
    %v161 = vld [vmem:[#allocation10 + $0x30] sm:$0xff]
    %v162 = vld [vmem:[#allocation10 + $0x38] sm:$0xff]
    %v163 = vld [vmem:[#allocation10 + $0x40] sm:$0xff]
    %v164 = vld [vmem:[#allocation10 + $0x48] sm:$0xff]
    %v165 = vld [vmem:[#allocation10 + $0x50] sm:$0xff]
    %v166 = vld [vmem:[#allocation10 + $0x58] sm:$0xff]
    %v167 = vld [vmem:[#allocation10 + $0x60] sm:$0xff]
    %v168 = vld [vmem:[#allocation10 + $0x68] sm:$0xff]
    %v169 = vld [vmem:[#allocation10 + $0x70] sm:$0xff]
    %v170 = vld [vmem:[#allocation10 + $0x78] sm:$0xff]
    %v171 = vld [vmem:[#allocation10 + $0x80] sm:$0xff]
    %v172 = vld [vmem:[#allocation10 + $0x88] sm:$0xff]
    %v173 = vld [vmem:[#allocation10 + $0x90] sm:$0xff]
    %v174 = vld [vmem:[#allocation10 + $0x98] sm:$0xff]
    %v175 = vld [vmem:[#allocation10 + $0xa0] sm:$0xff]
    %v176 = vld [vmem:[#allocation10 + $0xa8] sm:$0xff]
    %v177 = vld [vmem:[#allocation10 + $0xb0] sm:$0xff]
    %v178 = vld [vmem:[#allocation10 + $0xb8] sm:$0xff]
    %v179 = vld [vmem:[#allocation10 + $0xc0] sm:$0xff]
    %v180 = vld [vmem:[#allocation10 + $0xc8] sm:$0xff]
    %v181 = vld [vmem:[#allocation10 + $0xd0] sm:$0xff]
    %v182 = vld [vmem:[#allocation10 + $0xd8] sm:$0xff]
    %v183 = vld [vmem:[#allocation10 + $0xe0] sm:$0xff]
    %v184 = vld [vmem:[#allocation10 + $0xe8] sm:$0xff]
    %v185 = vld [vmem:[#allocation10 + $0xf0] sm:$0xff]
    %v186 = vld [vmem:[#allocation10 + $0xf8] sm:$0xff]
    %v187 = vld [vmem:[#allocation10 + $0x100] sm:$0xff]
    %v188 = vld [vmem:[#allocation10 + $0x108] sm:$0xff]
    %v189 = vld [vmem:[#allocation10 + $0x110] sm:$0xff]
    %v190 = vld [vmem:[#allocation10 + $0x118] sm:$0xff]
    %v191 = vld [vmem:[#allocation10 + $0x120] sm:$0xff]
    %v192 = vld [vmem:[#allocation10 + $0x128] sm:$0xff]
    %v193 = vld [vmem:[#allocation10 + $0x130] sm:$0xff]
    %v194 = vld [vmem:[#allocation10 + $0x138] sm:$0xff]
    %v195 = vld [vmem:[#allocation10 + $0x140] sm:$0xff]
    %v196 = vld [vmem:[#allocation10 + $0x148] sm:$0xff]
    %v197 = vld [vmem:[#allocation10 + $0x150] sm:$0xff]
    %v198 = vld [vmem:[#allocation10 + $0x158] sm:$0xff]
    %v199 = vld [vmem:[#allocation10 + $0x160] sm:$0xff]
    %v200 = vld [vmem:[#allocation10 + $0x168] sm:$0xff]
    %v201 = vld [vmem:[#allocation10 + $0x170] sm:$0xff]
    %v202 = vld [vmem:[#allocation10 + $0x178] sm:$0xff]
    %v203 = vld [vmem:[#allocation10 + $0x180] sm:$0xff]
    %v204 = vld [vmem:[#allocation10 + $0x188] sm:$0xff]
    %v205 = vld [vmem:[#allocation10 + $0x190] sm:$0xff]
    %v206 = vld [vmem:[#allocation10 + $0x198] sm:$0xff]
    %v207 = vld [vmem:[#allocation10 + $0x1a0] sm:$0xff]
    %v208 = vld [vmem:[#allocation10 + $0x1a8] sm:$0xff]
    %v209 = vld [vmem:[#allocation10 + $0x1b0] sm:$0xff]
    %v210 = vld [vmem:[#allocation10 + $0x1b8] sm:$0xff]
    %v211 = vld [vmem:[#allocation10 + $0x1c0] sm:$0xff]
    %v212 = vld [vmem:[#allocation10 + $0x1c8] sm:$0xff]
    %v213 = vld [vmem:[#allocation10 + $0x1d0] sm:$0xff]
    %v214 = vld [vmem:[#allocation10 + $0x1d8] sm:$0xff]
    %v215 = vld [vmem:[#allocation10 + $0x1e0] sm:$0xff]
    %v216 = vld [vmem:[#allocation10 + $0x1e8] sm:$0xff]
    %v217 = vld [vmem:[#allocation10 + $0x1f0] sm:$0xff]
    %v218 = vld [vmem:[#allocation10 + $0x1f8] sm:$0xff]
    %v219 = vld [vmem:[#allocation10 + $0x200] sm:$0xff]
    %v220 = vld [vmem:[#allocation10 + $0x208] sm:$0xff]
    %v221 = vld [vmem:[#allocation10 + $0x210] sm:$0xff]
    %v222 = vld [vmem:[#allocation10 + $0x218] sm:$0xff]
    %v223 = vld [vmem:[#allocation10 + $0x220] sm:$0xff]
    %v224 = vld [vmem:[#allocation10 + $0x228] sm:$0xff]
    %v225 = vld [vmem:[#allocation10 + $0x230] sm:$0xff]
    %v226 = vld [vmem:[#allocation10 + $0x238] sm:$0xff]
    %v227 = vld [vmem:[#allocation10 + $0x240] sm:$0xff]
    %v228 = vld [vmem:[#allocation10 + $0x248] sm:$0xff]
    %v229 = vld [vmem:[#allocation10 + $0x250] sm:$0xff]
    %v230 = vld [vmem:[#allocation10 + $0x258] sm:$0xff]
    %v231 = vld [vmem:[#allocation10 + $0x260] sm:$0xff]
    %v232 = vld [vmem:[#allocation10 + $0x268] sm:$0xff]
    %v233 = vld [vmem:[#allocation10 + $0x270] sm:$0xff]
    %v234 = vld [vmem:[#allocation10 + $0x278] sm:$0xff]
    %v235 = vld [vmem:[#allocation10 + $0x280] sm:$0xff]
    %v236 = vld [vmem:[#allocation10 + $0x288] sm:$0xff]
    %v237 = vld [vmem:[#allocation10 + $0x290] sm:$0xff]
    %v238 = vld [vmem:[#allocation10 + $0x298] sm:$0xff]
    %v239 = vld [vmem:[#allocation10 + $0x2a0] sm:$0xff]
    %v240 = vld [vmem:[#allocation10 + $0x2a8] sm:$0xff]
    %v241 = vld [vmem:[#allocation10 + $0x2b0] sm:$0xff]
    %v242 = vld [vmem:[#allocation10 + $0x2b8] sm:$0xff]
    %v243 = vld [vmem:[#allocation10 + $0x2c0] sm:$0xff]
    %v244 = vld [vmem:[#allocation10 + $0x2c8] sm:$0xff]
    %v245 = vld [vmem:[#allocation10 + $0x2d0] sm:$0xff]
    %v246 = vld [vmem:[#allocation10 + $0x2d8] sm:$0xff]
    %v247 = vld [vmem:[#allocation10 + $0x2e0] sm:$0xff]
    %v248 = vld [vmem:[#allocation10 + $0x2e8] sm:$0xff]
    %v249 = vld [vmem:[#allocation10 + $0x2f0] sm:$0xff]
    %v250 = vld [vmem:[#allocation10 + $0x2f8] sm:$0xff]
    %v251 = vld [vmem:[%s5] sm:$0x7]
    %v252 = vld [vmem:[#allocation5] sm:$0xff]
    %s253 = sld [smem:[#allocation4]]
    %s254 = smul.u32 %s253, 8
    %s255 = scalar_lea.vmem [#allocation2], %s254
    %v256 = vld [vmem:[%s255] sm:$0xff]
    %s257 = sld [smem:[#allocation4 + $0x80]]
    %s258 = smul.u32 %s257, 8
    %s259 = scalar_lea.vmem [#allocation2], %s258
    %v260 = vld [vmem:[%s259] sm:$0xff]
    %v262 = vlaneseq
    %v263 = vshrl.u32 %v262, 7
    %v264 = vsub.s32 0, %v263
    %v265 = vrot.slane %v154, %v264
    %v266 = vlaneseq
    %v267 = vshrl.u32 %v266, 7
    %v268 = vsub.s32 1, %v267
    %v269 = vrot.slane %v154, %v268
    %v270 = vlaneseq
    %v271 = vshrl.u32 %v270, 7
    %v272 = vsub.s32 2, %v271
    %v273 = vrot.slane %v154, %v272
    %277 = vmatprep.subr.mxu0 %v152
    %278 = vmatpush1.msra.mxu0 %v151
    %279 = vmatprep.subr.mxu0 %v149
    %280 = vmatpush1.msra.mxu0 %v148
    %281 = vmatprep.subr.mxu0 %v146
    %282 = vmatpush1.msra.mxu0 %v145
    %283 = vmatprep.subr.mxu0 %v143
    %284 = vmatpush1.msra.mxu0 %v142
    %285 = vmatprep.subr.mxu0 %v140
    %286 = vmatpush1.msra.mxu0 %v139
    %287 = vmatprep.subr.mxu0 %v137
    %288 = vmatpush1.msra.mxu0 %v136
    %289 = vmatprep.subr.mxu0 %v134
    %290 = vmatpush1.msra.mxu0 %v133
    %291 = vmatprep.subr.mxu0 %v131
    %292 = vmatpush1.msra.mxu0 %v130
    %293 = vmatprep.subr.mxu0 %v128
    %294 = vmatpush1.msra.mxu0 %v127
    %295 = vmatprep.subr.mxu0 %v125
    %296 = vmatpush1.msra.mxu0 %v124
    %297 = vmatprep.subr.mxu0 %v122
    %298 = vmatpush1.msra.mxu0 %v121
    %299 = vmatprep.subr.mxu0 %v119
    %300 = vmatpush1.msra.mxu0 %v118
    %301 = vmatprep.subr.mxu0 %v116
    %302 = vmatpush1.msra.mxu0 %v115
    %303 = vmatprep.subr.mxu0 %v113
    %304 = vmatpush1.msra.mxu0 %v112
    %305 = vmatprep.subr.mxu0 %v110
    %306 = vmatpush1.msra.mxu0 %v109
    %307 = vmatprep.subr.mxu0 %v107
    %308 = vmatpush1.msra.mxu0 %v106
    %309 = vmatprep.subr.mxu0 0.0
    %310 = vmatpush2.msra.mxu0 0.0
    %311 = vmatprep.subr.mxu0 0.0
    %312 = vmatpush2.msra.mxu0 0.0
    %313 = vmatprep.subr.mxu0 0.0
    %314 = vmatpush2.msra.mxu0 0.0
    %315 = vmatprep.subr.mxu0 0.0
    %316 = vmatpush2.msra.mxu0 0.0
    %317 = vmatprep.subr.mxu0 0.0
    %318 = vmatpush2.msra.mxu0 0.0
    %319 = vmatprep.subr.mxu0 0.0
    %320 = vmatpush2.msra.mxu0 0.0
    %321 = vmatprep.subr.mxu0 0.0
    %322 = vmatpush2.msra.mxu0 0.0
    %323 = vmatprep.subr.mxu0 0.0
    %324 = vmatpush2.msra.mxu0 0.0
    %325 = vmatprep.subr.mxu0 0.0
    %326 = vmatpush2.msra.mxu0 0.0
    %327 = vmatprep.subr.mxu0 0.0
    %328 = vmatpush2.msra.mxu0 0.0
    %329 = vmatprep.subr.mxu0 0.0
    %330 = vmatpush2.msra.mxu0 0.0
    %331 = vmatprep.subr.mxu0 0.0
    %332 = vmatpush2.msra.mxu0 0.0
    %333 = vmatprep.subr.mxu0 0.0
    %334 = vmatpush2.msra.mxu0 0.0
    %335 = vmatprep.subr.mxu0 0.0
    %336 = vmatpush2.msra.mxu0 0.0
    %337 = vmatprep.subr.mxu0 0.0
    %338 = vmatpush2.msra.mxu0 0.0
    %339 = vmatprep.subr.mxu0 0.0
    %340 = vmatpush2.msra.mxu0 0.0
    %341 = vmatprep.mubr.f32.mxu0 0.0
    %342 = vmatmul.mubr.f32.gmra.mxu0 %v252
    %v343 = vpop.f32.mrf.mxu0
    %v344 = vadd.f32 %v265, %v343
    %v345 = vpop.f32.mrf.mxu0
    %v346 = vadd.f32 %v269, %v345
    %347 = vdwg.mxu0
    %348 = vmatprep.subr.mxu0 0.0
    %349 = vmatpush1.msra.mxu0 %v153
    %350 = vmatprep.subr.mxu0 0.0
    %351 = vmatpush1.msra.mxu0 %v150
    %352 = vmatprep.subr.mxu0 0.0
    %353 = vmatpush1.msra.mxu0 %v147
    %354 = vmatprep.subr.mxu0 0.0
    %355 = vmatpush1.msra.mxu0 %v144
    %356 = vmatprep.subr.mxu0 0.0
    %357 = vmatpush1.msra.mxu0 %v141
    %358 = vmatprep.subr.mxu0 0.0
    %359 = vmatpush1.msra.mxu0 %v138
    %360 = vmatprep.subr.mxu0 0.0
    %361 = vmatpush1.msra.mxu0 %v135
    %362 = vmatprep.subr.mxu0 0.0
    %363 = vmatpush1.msra.mxu0 %v132
    %364 = vmatprep.subr.mxu0 0.0
    %365 = vmatpush1.msra.mxu0 %v129
    %366 = vmatprep.subr.mxu0 0.0
    %367 = vmatpush1.msra.mxu0 %v126
    %368 = vmatprep.subr.mxu0 0.0
    %369 = vmatpush1.msra.mxu0 %v123
    %370 = vmatprep.subr.mxu0 0.0
    %371 = vmatpush1.msra.mxu0 %v120
    %372 = vmatprep.subr.mxu0 0.0
    %373 = vmatpush1.msra.mxu0 %v117
    %374 = vmatprep.subr.mxu0 0.0
    %375 = vmatpush1.msra.mxu0 %v114
    %376 = vmatprep.subr.mxu0 0.0
    %377 = vmatpush1.msra.mxu0 %v111
    %378 = vmatprep.subr.mxu0 0.0
    %379 = vmatpush1.msra.mxu0 %v108
    %380 = vmatprep.subr.mxu0 0.0
    %381 = vmatpush2.msra.mxu0 0.0
    %382 = vmatprep.subr.mxu0 0.0
    %383 = vmatpush2.msra.mxu0 0.0
    %384 = vmatprep.subr.mxu0 0.0
    %385 = vmatpush2.msra.mxu0 0.0
    %386 = vmatprep.subr.mxu0 0.0
    %387 = vmatpush2.msra.mxu0 0.0
    %388 = vmatprep.subr.mxu0 0.0
    %389 = vmatpush2.msra.mxu0 0.0
    %390 = vmatprep.subr.mxu0 0.0
    %391 = vmatpush2.msra.mxu0 0.0
    %392 = vmatprep.subr.mxu0 0.0
    %393 = vmatpush2.msra.mxu0 0.0
    %394 = vmatprep.subr.mxu0 0.0
    %395 = vmatpush2.msra.mxu0 0.0
    %396 = vmatprep.subr.mxu0 0.0
    %397 = vmatpush2.msra.mxu0 0.0
    %398 = vmatprep.subr.mxu0 0.0
    %399 = vmatpush2.msra.mxu0 0.0
    %400 = vmatprep.subr.mxu0 0.0
    %401 = vmatpush2.msra.mxu0 0.0
    %402 = vmatprep.subr.mxu0 0.0
    %403 = vmatpush2.msra.mxu0 0.0
    %404 = vmatprep.subr.mxu0 0.0
    %405 = vmatpush2.msra.mxu0 0.0
    %406 = vmatprep.subr.mxu0 0.0
    %407 = vmatpush2.msra.mxu0 0.0
    %408 = vmatprep.subr.mxu0 0.0
    %409 = vmatpush2.msra.mxu0 0.0
    %410 = vmatprep.subr.mxu0 0.0
    %411 = vmatpush2.msra.mxu0 0.0
    %412 = vmatprep.mubr.f32.mxu0 0.0
    %413 = vmatmul.mubr.f32.gmra.mxu0 %v252
    %v414 = vpop.f32.mrf.mxu0
    %v415 = vadd.f32 %v273, %v414
    %v416 = vpop.f32.mrf.mxu0
    %417 = vdwg.mxu0
    %v419 = vlaneseq
    %v420 = vshrl.u32 %v419, 7
    %v421 = vsub.s32 0, %v420
    %v422 = vrot.slane %v251, %v421
    %v423 = vlaneseq
    %v424 = vshrl.u32 %v423, 7
    %v425 = vsub.s32 1, %v424
    %v426 = vrot.slane %v251, %v425
    %v427 = vlaneseq
    %v428 = vshrl.u32 %v427, 7
    %v429 = vsub.s32 2, %v428
    %v430 = vrot.slane %v251, %v429
    %434 = vmatprep.subr.mxu0 %v201
    %435 = vmatpush1.msra.mxu0 %v200
    %436 = vmatprep.subr.mxu0 %v198
    %437 = vmatpush1.msra.mxu0 %v197
    %438 = vmatprep.subr.mxu0 %v195
    %439 = vmatpush1.msra.mxu0 %v194
    %440 = vmatprep.subr.mxu0 %v192
    %441 = vmatpush1.msra.mxu0 %v191
    %442 = vmatprep.subr.mxu0 %v189
    %443 = vmatpush1.msra.mxu0 %v188
    %444 = vmatprep.subr.mxu0 %v186
    %445 = vmatpush1.msra.mxu0 %v185
    %446 = vmatprep.subr.mxu0 %v183
    %447 = vmatpush1.msra.mxu0 %v182
    %448 = vmatprep.subr.mxu0 %v180
    %449 = vmatpush1.msra.mxu0 %v179
    %450 = vmatprep.subr.mxu0 %v177
    %451 = vmatpush1.msra.mxu0 %v176
    %452 = vmatprep.subr.mxu0 %v174
    %453 = vmatpush1.msra.mxu0 %v173
    %454 = vmatprep.subr.mxu0 %v171
    %455 = vmatpush1.msra.mxu0 %v170
    %456 = vmatprep.subr.mxu0 %v168
    %457 = vmatpush1.msra.mxu0 %v167
    %458 = vmatprep.subr.mxu0 %v165
    %459 = vmatpush1.msra.mxu0 %v164
    %460 = vmatprep.subr.mxu0 %v162
    %461 = vmatpush1.msra.mxu0 %v161
    %462 = vmatprep.subr.mxu0 %v159
    %463 = vmatpush1.msra.mxu0 %v158
    %464 = vmatprep.subr.mxu0 %v156
    %465 = vmatpush1.msra.mxu0 %v155
    %466 = vmatprep.subr.mxu0 %v249
    %467 = vmatpush2.msra.mxu0 %v248
    %468 = vmatprep.subr.mxu0 %v246
    %469 = vmatpush2.msra.mxu0 %v245
    %470 = vmatprep.subr.mxu0 %v243
    %471 = vmatpush2.msra.mxu0 %v242
    %472 = vmatprep.subr.mxu0 %v240
    %473 = vmatpush2.msra.mxu0 %v239
    %474 = vmatprep.subr.mxu0 %v237
    %475 = vmatpush2.msra.mxu0 %v236
    %476 = vmatprep.subr.mxu0 %v234
    %477 = vmatpush2.msra.mxu0 %v233
    %478 = vmatprep.subr.mxu0 %v231
    %479 = vmatpush2.msra.mxu0 %v230
    %480 = vmatprep.subr.mxu0 %v228
    %481 = vmatpush2.msra.mxu0 %v227
    %482 = vmatprep.subr.mxu0 %v225
    %483 = vmatpush2.msra.mxu0 %v224
    %484 = vmatprep.subr.mxu0 %v222
    %485 = vmatpush2.msra.mxu0 %v221
    %486 = vmatprep.subr.mxu0 %v219
    %487 = vmatpush2.msra.mxu0 %v218
    %488 = vmatprep.subr.mxu0 %v216
    %489 = vmatpush2.msra.mxu0 %v215
    %490 = vmatprep.subr.mxu0 %v213
    %491 = vmatpush2.msra.mxu0 %v212
    %492 = vmatprep.subr.mxu0 %v210
    %493 = vmatpush2.msra.mxu0 %v209
    %494 = vmatprep.subr.mxu0 %v207
    %495 = vmatpush2.msra.mxu0 %v206
    %496 = vmatprep.subr.mxu0 %v204
    %497 = vmatpush2.msra.mxu0 %v203
    %498 = vmatprep.mubr.f32.mxu0 %v260
    %499 = vmatmul.mubr.f32.gmra.mxu0 %v256
    %v500 = vpop.f32.mrf.mxu0
    %v501 = vadd.f32 %v422, %v500
    %v502 = vpop.f32.mrf.mxu0
    %v503 = vadd.f32 %v426, %v502
    %504 = vdwg.mxu0
    %505 = vmatprep.subr.mxu0 0.0
    %506 = vmatpush1.msra.mxu0 %v202
    %507 = vmatprep.subr.mxu0 0.0
    %508 = vmatpush1.msra.mxu0 %v199
    %509 = vmatprep.subr.mxu0 0.0
    %510 = vmatpush1.msra.mxu0 %v196
    %511 = vmatprep.subr.mxu0 0.0
    %512 = vmatpush1.msra.mxu0 %v193
    %513 = vmatprep.subr.mxu0 0.0
    %514 = vmatpush1.msra.mxu0 %v190
    %515 = vmatprep.subr.mxu0 0.0
    %516 = vmatpush1.msra.mxu0 %v187
    %517 = vmatprep.subr.mxu0 0.0
    %518 = vmatpush1.msra.mxu0 %v184
    %519 = vmatprep.subr.mxu0 0.0
    %520 = vmatpush1.msra.mxu0 %v181
    %521 = vmatprep.subr.mxu0 0.0
    %522 = vmatpush1.msra.mxu0 %v178
    %523 = vmatprep.subr.mxu0 0.0
    %524 = vmatpush1.msra.mxu0 %v175
    %525 = vmatprep.subr.mxu0 0.0
    %526 = vmatpush1.msra.mxu0 %v172
    %527 = vmatprep.subr.mxu0 0.0
    %528 = vmatpush1.msra.mxu0 %v169
    %529 = vmatprep.subr.mxu0 0.0
    %530 = vmatpush1.msra.mxu0 %v166
    %531 = vmatprep.subr.mxu0 0.0
    %532 = vmatpush1.msra.mxu0 %v163
    %533 = vmatprep.subr.mxu0 0.0
    %534 = vmatpush1.msra.mxu0 %v160
    %535 = vmatprep.subr.mxu0 0.0
    %536 = vmatpush1.msra.mxu0 %v157
    %537 = vmatprep.subr.mxu0 0.0
    %538 = vmatpush2.msra.mxu0 %v250
    %539 = vmatprep.subr.mxu0 0.0
    %540 = vmatpush2.msra.mxu0 %v247
    %541 = vmatprep.subr.mxu0 0.0
    %542 = vmatpush2.msra.mxu0 %v244
    %543 = vmatprep.subr.mxu0 0.0
    %544 = vmatpush2.msra.mxu0 %v241
    %545 = vmatprep.subr.mxu0 0.0
    %546 = vmatpush2.msra.mxu0 %v238
    %547 = vmatprep.subr.mxu0 0.0
    %548 = vmatpush2.msra.mxu0 %v235
    %549 = vmatprep.subr.mxu0 0.0
    %550 = vmatpush2.msra.mxu0 %v232
    %551 = vmatprep.subr.mxu0 0.0
    %552 = vmatpush2.msra.mxu0 %v229
    %553 = vmatprep.subr.mxu0 0.0
    %554 = vmatpush2.msra.mxu0 %v226
    %555 = vmatprep.subr.mxu0 0.0
    %556 = vmatpush2.msra.mxu0 %v223
    %557 = vmatprep.subr.mxu0 0.0
    %558 = vmatpush2.msra.mxu0 %v220
    %559 = vmatprep.subr.mxu0 0.0
    %560 = vmatpush2.msra.mxu0 %v217
    %561 = vmatprep.subr.mxu0 0.0
    %562 = vmatpush2.msra.mxu0 %v214
    %563 = vmatprep.subr.mxu0 0.0
    %564 = vmatpush2.msra.mxu0 %v211
    %565 = vmatprep.subr.mxu0 0.0
    %566 = vmatpush2.msra.mxu0 %v208
    %567 = vmatprep.subr.mxu0 0.0
    %568 = vmatpush2.msra.mxu0 %v205
    %569 = vmatprep.mubr.f32.mxu0 %v260
    %570 = vmatmul.mubr.f32.gmra.mxu0 %v256
    %v571 = vpop.f32.mrf.mxu0
    %v572 = vadd.f32 %v430, %v571
    %v573 = vpop.f32.mrf.mxu0
    %574 = vdwg.mxu0
    %v575 = vadd.f32 %v344, %v501
    %v576 = vxor.u32 %v575, 2147483648
    %v577 = vmul.f32 %v576, 1.442695
    %v578 = vpow.pop %v577
    %v579 = vadd.f32 %v578, 1.0
    %v580 = vrcp.pop %v579
    %v581 = vmul.f32 1.0, %v580
    %v582 = vadd.f32 %v346, %v503
    %v583 = vxor.u32 %v582, 2147483648
    %v584 = vmul.f32 %v583, 1.442695
    %v585 = vpow.pop %v584
    %v586 = vadd.f32 %v585, 1.0
    %v587 = vrcp.pop %v586
    %v588 = vmul.f32 1.0, %v587
    %v589 = vmul.f32 %v581, %v572
    %v590 = vadd.f32 %v415, %v589
    %v591 = vtanh.pop %v590
    %v592 = vadd.f32 %v256, %v260
    %v593 = vmul.f32 %v592, 0.5
    %v594 = vsub.f32 %v593, %v591
    %v595 = vmul.f32 %v588, %v594
    %v596 = vadd.f32 %v591, %v595
    %s597 = scalar_lea.vmem [#allocation2], 8
    %598 = vst [vmem:[%s597] sm:$0xff] %v596
    %s599 = scalar_lea.vmem [#allocation5], 8
    %v600 = vld [vmem:[%s599] sm:$0xff]
    %s601 = sld [smem:[#allocation4 + $0x1]]
    %s602 = smul.u32 %s601, 8
    %s603 = scalar_lea.vmem [#allocation2], %s602
    %v604 = vld [vmem:[%s603] sm:$0xff]
    %s605 = sld [smem:[#allocation4 + $0x81]]
    %s606 = smul.u32 %s605, 8
    %s607 = scalar_lea.vmem [#allocation2], %s606
    %v608 = vld [vmem:[%s607] sm:$0xff]
    %609 = vmatprep.subr.mxu0 %v152
    %610 = vmatpush1.msra.mxu0 %v151
    %611 = vmatprep.subr.mxu0 %v149
    %612 = vmatpush1.msra.mxu0 %v148
    %613 = vmatprep.subr.mxu0 %v146
    %614 = vmatpush1.msra.mxu0 %v145
    %615 = vmatprep.subr.mxu0 %v143
    %616 = vmatpush1.msra.mxu0 %v142
    %617 = vmatprep.subr.mxu0 %v140
    %618 = vmatpush1.msra.mxu0 %v139
    %619 = vmatprep.subr.mxu0 %v137
    %620 = vmatpush1.msra.mxu0 %v136
    %621 = vmatprep.subr.mxu0 %v134
    %622 = vmatpush1.msra.mxu0 %v133
    %623 = vmatprep.subr.mxu0 %v131
    %624 = vmatpush1.msra.mxu0 %v130
    %625 = vmatprep.subr.mxu0 %v128
    %626 = vmatpush1.msra.mxu0 %v127
    %627 = vmatprep.subr.mxu0 %v125
    %628 = vmatpush1.msra.mxu0 %v124
    %629 = vmatprep.subr.mxu0 %v122
    %630 = vmatpush1.msra.mxu0 %v121
    %631 = vmatprep.subr.mxu0 %v119
    %632 = vmatpush1.msra.mxu0 %v118
    %633 = vmatprep.subr.mxu0 %v116
    %634 = vmatpush1.msra.mxu0 %v115
    %635 = vmatprep.subr.mxu0 %v113
    %636 = vmatpush1.msra.mxu0 %v112
    %637 = vmatprep.subr.mxu0 %v110
    %638 = vmatpush1.msra.mxu0 %v109
    %639 = vmatprep.subr.mxu0 %v107
    %640 = vmatpush1.msra.mxu0 %v106
    %641 = vmatprep.subr.mxu0 0.0
    %642 = vmatpush2.msra.mxu0 0.0
    %643 = vmatprep.subr.mxu0 0.0
    %644 = vmatpush2.msra.mxu0 0.0
    %645 = vmatprep.subr.mxu0 0.0
    %646 = vmatpush2.msra.mxu0 0.0
    %647 = vmatprep.subr.mxu0 0.0
    %648 = vmatpush2.msra.mxu0 0.0
    %649 = vmatprep.subr.mxu0 0.0
    %650 = vmatpush2.msra.mxu0 0.0
    %651 = vmatprep.subr.mxu0 0.0
    %652 = vmatpush2.msra.mxu0 0.0
    %653 = vmatprep.subr.mxu0 0.0
    %654 = vmatpush2.msra.mxu0 0.0
    %655 = vmatprep.subr.mxu0 0.0
    %656 = vmatpush2.msra.mxu0 0.0
    %657 = vmatprep.subr.mxu0 0.0
    %658 = vmatpush2.msra.mxu0 0.0
    %659 = vmatprep.subr.mxu0 0.0
    %660 = vmatpush2.msra.mxu0 0.0
    %661 = vmatprep.subr.mxu0 0.0
    %662 = vmatpush2.msra.mxu0 0.0
    %663 = vmatprep.subr.mxu0 0.0
    %664 = vmatpush2.msra.mxu0 0.0
    %665 = vmatprep.subr.mxu0 0.0
    %666 = vmatpush2.msra.mxu0 0.0
    %667 = vmatprep.subr.mxu0 0.0
    %668 = vmatpush2.msra.mxu0 0.0
    %669 = vmatprep.subr.mxu0 0.0
    %670 = vmatpush2.msra.mxu0 0.0
    %671 = vmatprep.subr.mxu0 0.0
    %672 = vmatpush2.msra.mxu0 0.0
    %673 = vmatprep.mubr.f32.mxu0 0.0
    %674 = vmatmul.mubr.f32.gmra.mxu0 %v600
    %v675 = vpop.f32.mrf.mxu0
    %v676 = vadd.f32 %v265, %v675
    %v677 = vpop.f32.mrf.mxu0
    %v678 = vadd.f32 %v269, %v677
    %679 = vdwg.mxu0
    %680 = vmatprep.subr.mxu0 0.0
    %681 = vmatpush1.msra.mxu0 %v153
    %682 = vmatprep.subr.mxu0 0.0
    %683 = vmatpush1.msra.mxu0 %v150
    %684 = vmatprep.subr.mxu0 0.0
    %685 = vmatpush1.msra.mxu0 %v147
    %686 = vmatprep.subr.mxu0 0.0
    %687 = vmatpush1.msra.mxu0 %v144
    %688 = vmatprep.subr.mxu0 0.0
    %689 = vmatpush1.msra.mxu0 %v141
    %690 = vmatprep.subr.mxu0 0.0
    %691 = vmatpush1.msra.mxu0 %v138
    %692 = vmatprep.subr.mxu0 0.0
    %693 = vmatpush1.msra.mxu0 %v135
    %694 = vmatprep.subr.mxu0 0.0
    %695 = vmatpush1.msra.mxu0 %v132
    %696 = vmatprep.subr.mxu0 0.0
    %697 = vmatpush1.msra.mxu0 %v129
    %698 = vmatprep.subr.mxu0 0.0
    %699 = vmatpush1.msra.mxu0 %v126
    %700 = vmatprep.subr.mxu0 0.0
    %701 = vmatpush1.msra.mxu0 %v123
    %702 = vmatprep.subr.mxu0 0.0
    %703 = vmatpush1.msra.mxu0 %v120
    %704 = vmatprep.subr.mxu0 0.0
    %705 = vmatpush1.msra.mxu0 %v117
    %706 = vmatprep.subr.mxu0 0.0
    %707 = vmatpush1.msra.mxu0 %v114
    %708 = vmatprep.subr.mxu0 0.0
    %709 = vmatpush1.msra.mxu0 %v111
    %710 = vmatprep.subr.mxu0 0.0
    %711 = vmatpush1.msra.mxu0 %v108
    %712 = vmatprep.subr.mxu0 0.0
    %713 = vmatpush2.msra.mxu0 0.0
    %714 = vmatprep.subr.mxu0 0.0
    %715 = vmatpush2.msra.mxu0 0.0
    %716 = vmatprep.subr.mxu0 0.0
    %717 = vmatpush2.msra.mxu0 0.0
    %718 = vmatprep.subr.mxu0 0.0
    %719 = vmatpush2.msra.mxu0 0.0
    %720 = vmatprep.subr.mxu0 0.0
    %721 = vmatpush2.msra.mxu0 0.0
    %722 = vmatprep.subr.mxu0 0.0
    %723 = vmatpush2.msra.mxu0 0.0
    %724 = vmatprep.subr.mxu0 0.0
    %725 = vmatpush2.msra.mxu0 0.0
    %726 = vmatprep.subr.mxu0 0.0
    %727 = vmatpush2.msra.mxu0 0.0
    %728 = vmatprep.subr.mxu0 0.0
    %729 = vmatpush2.msra.mxu0 0.0
    %730 = vmatprep.subr.mxu0 0.0
    %731 = vmatpush2.msra.mxu0 0.0
    %732 = vmatprep.subr.mxu0 0.0
    %733 = vmatpush2.msra.mxu0 0.0
    %734 = vmatprep.subr.mxu0 0.0
    %735 = vmatpush2.msra.mxu0 0.0
    %736 = vmatprep.subr.mxu0 0.0
    %737 = vmatpush2.msra.mxu0 0.0
    %738 = vmatprep.subr.mxu0 0.0
    %739 = vmatpush2.msra.mxu0 0.0
    %740 = vmatprep.subr.mxu0 0.0
    %741 = vmatpush2.msra.mxu0 0.0
    %742 = vmatprep.subr.mxu0 0.0
    %743 = vmatpush2.msra.mxu0 0.0
    %744 = vmatprep.mubr.f32.mxu0 0.0
    %745 = vmatmul.mubr.f32.gmra.mxu0 %v600
    %v746 = vpop.f32.mrf.mxu0
    %v747 = vadd.f32 %v273, %v746
    %v748 = vpop.f32.mrf.mxu0
    %749 = vdwg.mxu0
    %750 = vmatprep.subr.mxu0 %v201
    %751 = vmatpush1.msra.mxu0 %v200
    %752 = vmatprep.subr.mxu0 %v198
    %753 = vmatpush1.msra.mxu0 %v197
    %754 = vmatprep.subr.mxu0 %v195
    %755 = vmatpush1.msra.mxu0 %v194
    %756 = vmatprep.subr.mxu0 %v192
    %757 = vmatpush1.msra.mxu0 %v191
    %758 = vmatprep.subr.mxu0 %v189
    %759 = vmatpush1.msra.mxu0 %v188
    %760 = vmatprep.subr.mxu0 %v186
    %761 = vmatpush1.msra.mxu0 %v185
    %762 = vmatprep.subr.mxu0 %v183
    %763 = vmatpush1.msra.mxu0 %v182
    %764 = vmatprep.subr.mxu0 %v180
    %765 = vmatpush1.msra.mxu0 %v179
    %766 = vmatprep.subr.mxu0 %v177
    %767 = vmatpush1.msra.mxu0 %v176
    %768 = vmatprep.subr.mxu0 %v174
    %769 = vmatpush1.msra.mxu0 %v173
    %770 = vmatprep.subr.mxu0 %v171
    %771 = vmatpush1.msra.mxu0 %v170
    %772 = vmatprep.subr.mxu0 %v168
    %773 = vmatpush1.msra.mxu0 %v167
    %774 = vmatprep.subr.mxu0 %v165
    %775 = vmatpush1.msra.mxu0 %v164
    %776 = vmatprep.subr.mxu0 %v162
    %777 = vmatpush1.msra.mxu0 %v161
    %778 = vmatprep.subr.mxu0 %v159
    %779 = vmatpush1.msra.mxu0 %v158
    %780 = vmatprep.subr.mxu0 %v156
    %781 = vmatpush1.msra.mxu0 %v155
    %782 = vmatprep.subr.mxu0 %v249
    %783 = vmatpush2.msra.mxu0 %v248
    %784 = vmatprep.subr.mxu0 %v246
    %785 = vmatpush2.msra.mxu0 %v245
    %786 = vmatprep.subr.mxu0 %v243
    %787 = vmatpush2.msra.mxu0 %v242
    %788 = vmatprep.subr.mxu0 %v240
    %789 = vmatpush2.msra.mxu0 %v239
    %790 = vmatprep.subr.mxu0 %v237
    %791 = vmatpush2.msra.mxu0 %v236
    %792 = vmatprep.subr.mxu0 %v234
    %793 = vmatpush2.msra.mxu0 %v233
    %794 = vmatprep.subr.mxu0 %v231
    %795 = vmatpush2.msra.mxu0 %v230
    %796 = vmatprep.subr.mxu0 %v228
    %797 = vmatpush2.msra.mxu0 %v227
    %798 = vmatprep.subr.mxu0 %v225
    %799 = vmatpush2.msra.mxu0 %v224
    %800 = vmatprep.subr.mxu0 %v222
    %801 = vmatpush2.msra.mxu0 %v221
    %802 = vmatprep.subr.mxu0 %v219
    %803 = vmatpush2.msra.mxu0 %v218
    %804 = vmatprep.subr.mxu0 %v216
    %805 = vmatpush2.msra.mxu0 %v215
    %806 = vmatprep.subr.mxu0 %v213
    %807 = vmatpush2.msra.mxu0 %v212
    %808 = vmatprep.subr.mxu0 %v210
    %809 = vmatpush2.msra.mxu0 %v209
    %810 = vmatprep.subr.mxu0 %v207
    %811 = vmatpush2.msra.mxu0 %v206
    %812 = vmatprep.subr.mxu0 %v204
    %813 = vmatpush2.msra.mxu0 %v203
    %814 = vmatprep.mubr.f32.mxu0 %v608
    %815 = vmatmul.mubr.f32.gmra.mxu0 %v604
    %v816 = vpop.f32.mrf.mxu0
    %v817 = vadd.f32 %v422, %v816
    %v818 = vpop.f32.mrf.mxu0
    %v819 = vadd.f32 %v426, %v818
    %820 = vdwg.mxu0
    %821 = vmatprep.subr.mxu0 0.0
    %822 = vmatpush1.msra.mxu0 %v202
    %823 = vmatprep.subr.mxu0 0.0
    %824 = vmatpush1.msra.mxu0 %v199
    %825 = vmatprep.subr.mxu0 0.0
    %826 = vmatpush1.msra.mxu0 %v196
    %827 = vmatprep.subr.mxu0 0.0
    %828 = vmatpush1.msra.mxu0 %v193
    %829 = vmatprep.subr.mxu0 0.0
    %830 = vmatpush1.msra.mxu0 %v190
    %831 = vmatprep.subr.mxu0 0.0
    %832 = vmatpush1.msra.mxu0 %v187
    %833 = vmatprep.subr.mxu0 0.0
    %834 = vmatpush1.msra.mxu0 %v184
    %835 = vmatprep.subr.mxu0 0.0
    %836 = vmatpush1.msra.mxu0 %v181
    %837 = vmatprep.subr.mxu0 0.0
    %838 = vmatpush1.msra.mxu0 %v178
    %839 = vmatprep.subr.mxu0 0.0
    %840 = vmatpush1.msra.mxu0 %v175
    %841 = vmatprep.subr.mxu0 0.0
    %842 = vmatpush1.msra.mxu0 %v172
    %843 = vmatprep.subr.mxu0 0.0
    %844 = vmatpush1.msra.mxu0 %v169
    %845 = vmatprep.subr.mxu0 0.0
    %846 = vmatpush1.msra.mxu0 %v166
    %847 = vmatprep.subr.mxu0 0.0
    %848 = vmatpush1.msra.mxu0 %v163
    %849 = vmatprep.subr.mxu0 0.0
    %850 = vmatpush1.msra.mxu0 %v160
    %851 = vmatprep.subr.mxu0 0.0
    %852 = vmatpush1.msra.mxu0 %v157
    %853 = vmatprep.subr.mxu0 0.0
    %854 = vmatpush2.msra.mxu0 %v250
    %855 = vmatprep.subr.mxu0 0.0
    %856 = vmatpush2.msra.mxu0 %v247
    %857 = vmatprep.subr.mxu0 0.0
    %858 = vmatpush2.msra.mxu0 %v244
    %859 = vmatprep.subr.mxu0 0.0
    %860 = vmatpush2.msra.mxu0 %v241
    %861 = vmatprep.subr.mxu0 0.0
    %862 = vmatpush2.msra.mxu0 %v238
    %863 = vmatprep.subr.mxu0 0.0
    %864 = vmatpush2.msra.mxu0 %v235
    %865 = vmatprep.subr.mxu0 0.0
    %866 = vmatpush2.msra.mxu0 %v232
    %867 = vmatprep.subr.mxu0 0.0
    %868 = vmatpush2.msra.mxu0 %v229
    %869 = vmatprep.subr.mxu0 0.0
    %870 = vmatpush2.msra.mxu0 %v226
    %871 = vmatprep.subr.mxu0 0.0
    %872 = vmatpush2.msra.mxu0 %v223
    %873 = vmatprep.subr.mxu0 0.0
    %874 = vmatpush2.msra.mxu0 %v220
    %875 = vmatprep.subr.mxu0 0.0
    %876 = vmatpush2.msra.mxu0 %v217
    %877 = vmatprep.subr.mxu0 0.0
    %878 = vmatpush2.msra.mxu0 %v214
    %879 = vmatprep.subr.mxu0 0.0
    %880 = vmatpush2.msra.mxu0 %v211
    %881 = vmatprep.subr.mxu0 0.0
    %882 = vmatpush2.msra.mxu0 %v208
    %883 = vmatprep.subr.mxu0 0.0
    %884 = vmatpush2.msra.mxu0 %v205
    %885 = vmatprep.mubr.f32.mxu0 %v608
    %886 = vmatmul.mubr.f32.gmra.mxu0 %v604
    %v887 = vpop.f32.mrf.mxu0
    %v888 = vadd.f32 %v430, %v887
    %v889 = vpop.f32.mrf.mxu0
    %890 = vdwg.mxu0
    %v891 = vadd.f32 %v676, %v817
    %v892 = vxor.u32 %v891, 2147483648
    %v893 = vmul.f32 %v892, 1.442695
    %v894 = vpow.pop %v893
    %v895 = vadd.f32 %v894, 1.0
    %v896 = vrcp.pop %v895
    %v897 = vmul.f32 1.0, %v896
    %v898 = vadd.f32 %v678, %v819
    %v899 = vxor.u32 %v898, 2147483648
    %v900 = vmul.f32 %v899, 1.442695
    %v901 = vpow.pop %v900
    %v902 = vadd.f32 %v901, 1.0
    %v903 = vrcp.pop %v902
    %v904 = vmul.f32 1.0, %v903
    %v905 = vmul.f32 %v897, %v888
    %v906 = vadd.f32 %v747, %v905
    %v907 = vtanh.pop %v906
    %v908 = vadd.f32 %v604, %v608
    %v909 = vmul.f32 %v908, 0.5
    %v910 = vsub.f32 %v909, %v907
    %v911 = vmul.f32 %v904, %v910
    %v912 = vadd.f32 %v907, %v911
    %s913 = scalar_lea.vmem [#allocation2], 16
    %914 = vst [vmem:[%s913] sm:$0xff] %v912
    %s915 = scalar_lea.vmem [#allocation5], 16
    %v916 = vld [vmem:[%s915] sm:$0xff]
    %s917 = sld [smem:[#allocation4 + $0x2]]
    %s918 = smul.u32 %s917, 8
    %s919 = scalar_lea.vmem [#allocation2], %s918
    %v920 = vld [vmem:[%s919] sm:$0xff]
    %s921 = sld [smem:[#allocation4 + $0x82]]
    %s922 = smul.u32 %s921, 8
    %s923 = scalar_lea.vmem [#allocation2], %s922
    %v924 = vld [vmem:[%s923] sm:$0xff]
    %925 = vmatprep.subr.mxu0 %v152
    %926 = vmatpush1.msra.mxu0 %v151
    %927 = vmatprep.subr.mxu0 %v149
    %928 = vmatpush1.msra.mxu0 %v148
    %929 = vmatprep.subr.mxu0 %v146
    %930 = vmatpush1.msra.mxu0 %v145
    %931 = vmatprep.subr.mxu0 %v143
    %932 = vmatpush1.msra.mxu0 %v142
    %933 = vmatprep.subr.mxu0 %v140
    %934 = vmatpush1.msra.mxu0 %v139
    %935 = vmatprep.subr.mxu0 %v137
    %936 = vmatpush1.msra.mxu0 %v136
    %937 = vmatprep.subr.mxu0 %v134
    %938 = vmatpush1.msra.mxu0 %v133
    %939 = vmatprep.subr.mxu0 %v131
    %940 = vmatpush1.msra.mxu0 %v130
    %941 = vmatprep.subr.mxu0 %v128
    %942 = vmatpush1.msra.mxu0 %v127
    %943 = vmatprep.subr.mxu0 %v125
    %944 = vmatpush1.msra.mxu0 %v124
    %945 = vmatprep.subr.mxu0 %v122
    %946 = vmatpush1.msra.mxu0 %v121
    %947 = vmatprep.subr.mxu0 %v119
    %948 = vmatpush1.msra.mxu0 %v118
    %949 = vmatprep.subr.mxu0 %v116
    %950 = vmatpush1.msra.mxu0 %v115
    %951 = vmatprep.subr.mxu0 %v113
    %952 = vmatpush1.msra.mxu0 %v112
    %953 = vmatprep.subr.mxu0 %v110
    %954 = vmatpush1.msra.mxu0 %v109
    %955 = vmatprep.subr.mxu0 %v107
    %956 = vmatpush1.msra.mxu0 %v106
    %957 = vmatprep.subr.mxu0 0.0
    %958 = vmatpush2.msra.mxu0 0.0
    %959 = vmatprep.subr.mxu0 0.0
    %960 = vmatpush2.msra.mxu0 0.0
    %961 = vmatprep.subr.mxu0 0.0
    %962 = vmatpush2.msra.mxu0 0.0
    %963 = vmatprep.subr.mxu0 0.0
    %964 = vmatpush2.msra.mxu0 0.0
    %965 = vmatprep.subr.mxu0 0.0
    %966 = vmatpush2.msra.mxu0 0.0
    %967 = vmatprep.subr.mxu0 0.0
    %968 = vmatpush2.msra.mxu0 0.0
    %969 = vmatprep.subr.mxu0 0.0
    %970 = vmatpush2.msra.mxu0 0.0
    %971 = vmatprep.subr.mxu0 0.0
    %972 = vmatpush2.msra.mxu0 0.0
    %973 = vmatprep.subr.mxu0 0.0
    %974 = vmatpush2.msra.mxu0 0.0
    %975 = vmatprep.subr.mxu0 0.0
    %976 = vmatpush2.msra.mxu0 0.0
    %977 = vmatprep.subr.mxu0 0.0
    %978 = vmatpush2.msra.mxu0 0.0
    %979 = vmatprep.subr.mxu0 0.0
    %980 = vmatpush2.msra.mxu0 0.0
    %981 = vmatprep.subr.mxu0 0.0
    %982 = vmatpush2.msra.mxu0 0.0
    %983 = vmatprep.subr.mxu0 0.0
    %984 = vmatpush2.msra.mxu0 0.0
    %985 = vmatprep.subr.mxu0 0.0
    %986 = vmatpush2.msra.mxu0 0.0
    %987 = vmatprep.subr.mxu0 0.0
    %988 = vmatpush2.msra.mxu0 0.0
    %989 = vmatprep.mubr.f32.mxu0 0.0
    %990 = vmatmul.mubr.f32.gmra.mxu0 %v916
    %v991 = vpop.f32.mrf.mxu0
    %v992 = vadd.f32 %v265, %v991
    %v993 = vpop.f32.mrf.mxu0
    %v994 = vadd.f32 %v269, %v993
    %995 = vdwg.mxu0
    %996 = vmatprep.subr.mxu0 0.0
    %997 = vmatpush1.msra.mxu0 %v153
    %998 = vmatprep.subr.mxu0 0.0
    %999 = vmatpush1.msra.mxu0 %v150
    %1000 = vmatprep.subr.mxu0 0.0
    %1001 = vmatpush1.msra.mxu0 %v147
    %1002 = vmatprep.subr.mxu0 0.0
    %1003 = vmatpush1.msra.mxu0 %v144
    %1004 = vmatprep.subr.mxu0 0.0
    %1005 = vmatpush1.msra.mxu0 %v141
    %1006 = vmatprep.subr.mxu0 0.0
    %1007 = vmatpush1.msra.mxu0 %v138
    %1008 = vmatprep.subr.mxu0 0.0
    %1009 = vmatpush1.msra.mxu0 %v135
    %1010 = vmatprep.subr.mxu0 0.0
    %1011 = vmatpush1.msra.mxu0 %v132
    %1012 = vmatprep.subr.mxu0 0.0
    %1013 = vmatpush1.msra.mxu0 %v129
    %1014 = vmatprep.subr.mxu0 0.0
    %1015 = vmatpush1.msra.mxu0 %v126
    %1016 = vmatprep.subr.mxu0 0.0
    %1017 = vmatpush1.msra.mxu0 %v123
    %1018 = vmatprep.subr.mxu0 0.0
    %1019 = vmatpush1.msra.mxu0 %v120
    %1020 = vmatprep.subr.mxu0 0.0
    %1021 = vmatpush1.msra.mxu0 %v117
    %1022 = vmatprep.subr.mxu0 0.0
    %1023 = vmatpush1.msra.mxu0 %v114
    %1024 = vmatprep.subr.mxu0 0.0
    %1025 = vmatpush1.msra.mxu0 %v111
    %1026 = vmatprep.subr.mxu0 0.0
    %1027 = vmatpush1.msra.mxu0 %v108
    %1028 = vmatprep.subr.mxu0 0.0
    %1029 = vmatpush2.msra.mxu0 0.0
    %1030 = vmatprep.subr.mxu0 0.0
    %1031 = vmatpush2.msra.mxu0 0.0
    %1032 = vmatprep.subr.mxu0 0.0
    %1033 = vmatpush2.msra.mxu0 0.0
    %1034 = vmatprep.subr.mxu0 0.0
    %1035 = vmatpush2.msra.mxu0 0.0
    %1036 = vmatprep.subr.mxu0 0.0
    %1037 = vmatpush2.msra.mxu0 0.0
    %1038 = vmatprep.subr.mxu0 0.0
    %1039 = vmatpush2.msra.mxu0 0.0
    %1040 = vmatprep.subr.mxu0 0.0
    %1041 = vmatpush2.msra.mxu0 0.0
    %1042 = vmatprep.subr.mxu0 0.0
    %1043 = vmatpush2.msra.mxu0 0.0
    %1044 = vmatprep.subr.mxu0 0.0
    %1045 = vmatpush2.msra.mxu0 0.0
    %1046 = vmatprep.subr.mxu0 0.0
    %1047 = vmatpush2.msra.mxu0 0.0
    %1048 = vmatprep.subr.mxu0 0.0
    %1049 = vmatpush2.msra.mxu0 0.0
    %1050 = vmatprep.subr.mxu0 0.0
    %1051 = vmatpush2.msra.mxu0 0.0
    %1052 = vmatprep.subr.mxu0 0.0
    %1053 = vmatpush2.msra.mxu0 0.0
    %1054 = vmatprep.subr.mxu0 0.0
    %1055 = vmatpush2.msra.mxu0 0.0
    %1056 = vmatprep.subr.mxu0 0.0
    %1057 = vmatpush2.msra.mxu0 0.0
    %1058 = vmatprep.subr.mxu0 0.0
    %1059 = vmatpush2.msra.mxu0 0.0
    %1060 = vmatprep.mubr.f32.mxu0 0.0
    %1061 = vmatmul.mubr.f32.gmra.mxu0 %v916
    %v1062 = vpop.f32.mrf.mxu0
    %v1063 = vadd.f32 %v273, %v1062
    %v1064 = vpop.f32.mrf.mxu0
    %1065 = vdwg.mxu0
    %1066 = vmatprep.subr.mxu0 %v201
    %1067 = vmatpush1.msra.mxu0 %v200
    %1068 = vmatprep.subr.mxu0 %v198
    %1069 = vmatpush1.msra.mxu0 %v197
    %1070 = vmatprep.subr.mxu0 %v195
    %1071 = vmatpush1.msra.mxu0 %v194
    %1072 = vmatprep.subr.mxu0 %v192
    %1073 = vmatpush1.msra.mxu0 %v191
    %1074 = vmatprep.subr.mxu0 %v189
    %1075 = vmatpush1.msra.mxu0 %v188
    %1076 = vmatprep.subr.mxu0 %v186
    %1077 = vmatpush1.msra.mxu0 %v185
    %1078 = vmatprep.subr.mxu0 %v183
    %1079 = vmatpush1.msra.mxu0 %v182
    %1080 = vmatprep.subr.mxu0 %v180
    %1081 = vmatpush1.msra.mxu0 %v179
    %1082 = vmatprep.subr.mxu0 %v177
    %1083 = vmatpush1.msra.mxu0 %v176
    %1084 = vmatprep.subr.mxu0 %v174
    %1085 = vmatpush1.msra.mxu0 %v173
    %1086 = vmatprep.subr.mxu0 %v171
    %1087 = vmatpush1.msra.mxu0 %v170
    %1088 = vmatprep.subr.mxu0 %v168
    %1089 = vmatpush1.msra.mxu0 %v167
    %1090 = vmatprep.subr.mxu0 %v165
    %1091 = vmatpush1.msra.mxu0 %v164
    %1092 = vmatprep.subr.mxu0 %v162
    %1093 = vmatpush1.msra.mxu0 %v161
    %1094 = vmatprep.subr.mxu0 %v159
    %1095 = vmatpush1.msra.mxu0 %v158
    %1096 = vmatprep.subr.mxu0 %v156
    %1097 = vmatpush1.msra.mxu0 %v155
    %1098 = vmatprep.subr.mxu0 %v249
    %1099 = vmatpush2.msra.mxu0 %v248
    %1100 = vmatprep.subr.mxu0 %v246
    %1101 = vmatpush2.msra.mxu0 %v245
    %1102 = vmatprep.subr.mxu0 %v243
    %1103 = vmatpush2.msra.mxu0 %v242
    %1104 = vmatprep.subr.mxu0 %v240
    %1105 = vmatpush2.msra.mxu0 %v239
    %1106 = vmatprep.subr.mxu0 %v237
    %1107 = vmatpush2.msra.mxu0 %v236
    %1108 = vmatprep.subr.mxu0 %v234
    %1109 = vmatpush2.msra.mxu0 %v233
    %1110 = vmatprep.subr.mxu0 %v231
    %1111 = vmatpush2.msra.mxu0 %v230
    %1112 = vmatprep.subr.mxu0 %v228
    %1113 = vmatpush2.msra.mxu0 %v227
    %1114 = vmatprep.subr.mxu0 %v225
    %1115 = vmatpush2.msra.mxu0 %v224
    %1116 = vmatprep.subr.mxu0 %v222
    %1117 = vmatpush2.msra.mxu0 %v221
    %1118 = vmatprep.subr.mxu0 %v219
    %1119 = vmatpush2.msra.mxu0 %v218
    %1120 = vmatprep.subr.mxu0 %v216
    %1121 = vmatpush2.msra.mxu0 %v215
    %1122 = vmatprep.subr.mxu0 %v213
    %1123 = vmatpush2.msra.mxu0 %v212
    %1124 = vmatprep.subr.mxu0 %v210
    %1125 = vmatpush2.msra.mxu0 %v209
    %1126 = vmatprep.subr.mxu0 %v207
    %1127 = vmatpush2.msra.mxu0 %v206
    %1128 = vmatprep.subr.mxu0 %v204
    %1129 = vmatpush2.msra.mxu0 %v203
    %1130 = vmatprep.mubr.f32.mxu0 %v924
    %1131 = vmatmul.mubr.f32.gmra.mxu0 %v920
    %v1132 = vpop.f32.mrf.mxu0
    %v1133 = vadd.f32 %v422, %v1132
    %v1134 = vpop.f32.mrf.mxu0
    %v1135 = vadd.f32 %v426, %v1134
    %1136 = vdwg.mxu0
    %1137 = vmatprep.subr.mxu0 0.0
    %1138 = vmatpush1.msra.mxu0 %v202
    %1139 = vmatprep.subr.mxu0 0.0
    %1140 = vmatpush1.msra.mxu0 %v199
    %1141 = vmatprep.subr.mxu0 0.0
    %1142 = vmatpush1.msra.mxu0 %v196
    %1143 = vmatprep.subr.mxu0 0.0
    %1144 = vmatpush1.msra.mxu0 %v193
    %1145 = vmatprep.subr.mxu0 0.0
    %1146 = vmatpush1.msra.mxu0 %v190
    %1147 = vmatprep.subr.mxu0 0.0
    %1148 = vmatpush1.msra.mxu0 %v187
    %1149 = vmatprep.subr.mxu0 0.0
    %1150 = vmatpush1.msra.mxu0 %v184
    %1151 = vmatprep.subr.mxu0 0.0
    %1152 = vmatpush1.msra.mxu0 %v181
    %1153 = vmatprep.subr.mxu0 0.0
    %1154 = vmatpush1.msra.mxu0 %v178
    %1155 = vmatprep.subr.mxu0 0.0
    %1156 = vmatpush1.msra.mxu0 %v175
    %1157 = vmatprep.subr.mxu0 0.0
    %1158 = vmatpush1.msra.mxu0 %v172
    %1159 = vmatprep.subr.mxu0 0.0
    %1160 = vmatpush1.msra.mxu0 %v169
    %1161 = vmatprep.subr.mxu0 0.0
    %1162 = vmatpush1.msra.mxu0 %v166
    %1163 = vmatprep.subr.mxu0 0.0
    %1164 = vmatpush1.msra.mxu0 %v163
    %1165 = vmatprep.subr.mxu0 0.0
    %1166 = vmatpush1.msra.mxu0 %v160
    %1167 = vmatprep.subr.mxu0 0.0
    %1168 = vmatpush1.msra.mxu0 %v157
    %1169 = vmatprep.subr.mxu0 0.0
    %1170 = vmatpush2.msra.mxu0 %v250
    %1171 = vmatprep.subr.mxu0 0.0
    %1172 = vmatpush2.msra.mxu0 %v247
    %1173 = vmatprep.subr.mxu0 0.0
    %1174 = vmatpush2.msra.mxu0 %v244
    %1175 = vmatprep.subr.mxu0 0.0
    %1176 = vmatpush2.msra.mxu0 %v241
    %1177 = vmatprep.subr.mxu0 0.0
    %1178 = vmatpush2.msra.mxu0 %v238
    %1179 = vmatprep.subr.mxu0 0.0
    %1180 = vmatpush2.msra.mxu0 %v235
    %1181 = vmatprep.subr.mxu0 0.0
    %1182 = vmatpush2.msra.mxu0 %v232
    %1183 = vmatprep.subr.mxu0 0.0
    %1184 = vmatpush2.msra.mxu0 %v229
    %1185 = vmatprep.subr.mxu0 0.0
    %1186 = vmatpush2.msra.mxu0 %v226
    %1187 = vmatprep.subr.mxu0 0.0
    %1188 = vmatpush2.msra.mxu0 %v223
    %1189 = vmatprep.subr.mxu0 0.0
    %1190 = vmatpush2.msra.mxu0 %v220
    %1191 = vmatprep.subr.mxu0 0.0
    %1192 = vmatpush2.msra.mxu0 %v217
    %1193 = vmatprep.subr.mxu0 0.0
    %1194 = vmatpush2.msra.mxu0 %v214
    %1195 = vmatprep.subr.mxu0 0.0
    %1196 = vmatpush2.msra.mxu0 %v211
    %1197 = vmatprep.subr.mxu0 0.0
    %1198 = vmatpush2.msra.mxu0 %v208
    %1199 = vmatprep.subr.mxu0 0.0
    %1200 = vmatpush2.msra.mxu0 %v205
    %1201 = vmatprep.mubr.f32.mxu0 %v924
    %1202 = vmatmul.mubr.f32.gmra.mxu0 %v920
    %v1203 = vpop.f32.mrf.mxu0
    %v1204 = vadd.f32 %v430, %v1203
    %v1205 = vpop.f32.mrf.mxu0
    %1206 = vdwg.mxu0
    %v1207 = vadd.f32 %v992, %v1133
    %v1208 = vxor.u32 %v1207, 2147483648
    %v1209 = vmul.f32 %v1208, 1.442695
    %v1210 = vpow.pop %v1209
    %v1211 = vadd.f32 %v1210, 1.0
    %v1212 = vrcp.pop %v1211
    %v1213 = vmul.f32 1.0, %v1212
    %v1214 = vadd.f32 %v994, %v1135
    %v1215 = vxor.u32 %v1214, 2147483648
    %v1216 = vmul.f32 %v1215, 1.442695
    %v1217 = vpow.pop %v1216
    %v1218 = vadd.f32 %v1217, 1.0
    %v1219 = vrcp.pop %v1218
    %v1220 = vmul.f32 1.0, %v1219
    %v1221 = vmul.f32 %v1213, %v1204
    %v1222 = vadd.f32 %v1063, %v1221
    %v1223 = vtanh.pop %v1222
    %v1224 = vadd.f32 %v920, %v924
    %v1225 = vmul.f32 %v1224, 0.5
    %v1226 = vsub.f32 %v1225, %v1223
    %v1227 = vmul.f32 %v1220, %v1226
    %v1228 = vadd.f32 %v1223, %v1227
    %s1229 = scalar_lea.vmem [#allocation2], 24
    %1230 = vst [vmem:[%s1229] sm:$0xff] %v1228
    %s1231 = scalar_lea.vmem [#allocation5], 24
    %v1232 = vld [vmem:[%s1231] sm:$0xff]
    %s1233 = sld [smem:[#allocation4 + $0x3]]
    %s1234 = smul.u32 %s1233, 8
    %s1235 = scalar_lea.vmem [#allocation2], %s1234
    %v1236 = vld [vmem:[%s1235] sm:$0xff]
    %s1237 = sld [smem:[#allocation4 + $0x83]]
    %s1238 = smul.u32 %s1237, 8
    %s1239 = scalar_lea.vmem [#allocation2], %s1238
    %v1240 = vld [vmem:[%s1239] sm:$0xff]
    %1241 = vmatprep.subr.mxu0 %v152
    %1242 = vmatpush1.msra.mxu0 %v151
    %1243 = vmatprep.subr.mxu0 %v149
    %1244 = vmatpush1.msra.mxu0 %v148
    %1245 = vmatprep.subr.mxu0 %v146
    %1246 = vmatpush1.msra.mxu0 %v145
    %1247 = vmatprep.subr.mxu0 %v143
    %1248 = vmatpush1.msra.mxu0 %v142
    %1249 = vmatprep.subr.mxu0 %v140
    %1250 = vmatpush1.msra.mxu0 %v139
    %1251 = vmatprep.subr.mxu0 %v137
    %1252 = vmatpush1.msra.mxu0 %v136
    %1253 = vmatprep.subr.mxu0 %v134
    %1254 = vmatpush1.msra.mxu0 %v133
    %1255 = vmatprep.subr.mxu0 %v131
    %1256 = vmatpush1.msra.mxu0 %v130
    %1257 = vmatprep.subr.mxu0 %v128
    %1258 = vmatpush1.msra.mxu0 %v127
    %1259 = vmatprep.subr.mxu0 %v125
    %1260 = vmatpush1.msra.mxu0 %v124
    %1261 = vmatprep.subr.mxu0 %v122
    %1262 = vmatpush1.msra.mxu0 %v121
    %1263 = vmatprep.subr.mxu0 %v119
    %1264 = vmatpush1.msra.mxu0 %v118
    %1265 = vmatprep.subr.mxu0 %v116
    %1266 = vmatpush1.msra.mxu0 %v115
    %1267 = vmatprep.subr.mxu0 %v113
    %1268 = vmatpush1.msra.mxu0 %v112
    %1269 = vmatprep.subr.mxu0 %v110
    %1270 = vmatpush1.msra.mxu0 %v109
    %1271 = vmatprep.subr.mxu0 %v107
    %1272 = vmatpush1.msra.mxu0 %v106
    %1273 = vmatprep.subr.mxu0 0.0
    %1274 = vmatpush2.msra.mxu0 0.0
    %1275 = vmatprep.subr.mxu0 0.0
    %1276 = vmatpush2.msra.mxu0 0.0
    %1277 = vmatprep.subr.mxu0 0.0
    %1278 = vmatpush2.msra.mxu0 0.0
    %1279 = vmatprep.subr.mxu0 0.0
    %1280 = vmatpush2.msra.mxu0 0.0
    %1281 = vmatprep.subr.mxu0 0.0
    %1282 = vmatpush2.msra.mxu0 0.0
    %1283 = vmatprep.subr.mxu0 0.0
    %1284 = vmatpush2.msra.mxu0 0.0
    %1285 = vmatprep.subr.mxu0 0.0
    %1286 = vmatpush2.msra.mxu0 0.0
    %1287 = vmatprep.subr.mxu0 0.0
    %1288 = vmatpush2.msra.mxu0 0.0
    %1289 = vmatprep.subr.mxu0 0.0
    %1290 = vmatpush2.msra.mxu0 0.0
    %1291 = vmatprep.subr.mxu0 0.0
    %1292 = vmatpush2.msra.mxu0 0.0
    %1293 = vmatprep.subr.mxu0 0.0
    %1294 = vmatpush2.msra.mxu0 0.0
    %1295 = vmatprep.subr.mxu0 0.0
    %1296 = vmatpush2.msra.mxu0 0.0
    %1297 = vmatprep.subr.mxu0 0.0
    %1298 = vmatpush2.msra.mxu0 0.0
    %1299 = vmatprep.subr.mxu0 0.0
    %1300 = vmatpush2.msra.mxu0 0.0
    %1301 = vmatprep.subr.mxu0 0.0
    %1302 = vmatpush2.msra.mxu0 0.0
    %1303 = vmatprep.subr.mxu0 0.0
    %1304 = vmatpush2.msra.mxu0 0.0
    %1305 = vmatprep.mubr.f32.mxu0 0.0
    %1306 = vmatmul.mubr.f32.gmra.mxu0 %v1232
    %v1307 = vpop.f32.mrf.mxu0
    %v1308 = vadd.f32 %v265, %v1307
    %v1309 = vpop.f32.mrf.mxu0
    %v1310 = vadd.f32 %v269, %v1309
    %1311 = vdwg.mxu0
    %1312 = vmatprep.subr.mxu0 0.0
    %1313 = vmatpush1.msra.mxu0 %v153
    %1314 = vmatprep.subr.mxu0 0.0
    %1315 = vmatpush1.msra.mxu0 %v150
    %1316 = vmatprep.subr.mxu0 0.0
    %1317 = vmatpush1.msra.mxu0 %v147
    %1318 = vmatprep.subr.mxu0 0.0
    %1319 = vmatpush1.msra.mxu0 %v144
    %1320 = vmatprep.subr.mxu0 0.0
    %1321 = vmatpush1.msra.mxu0 %v141
    %1322 = vmatprep.subr.mxu0 0.0
    %1323 = vmatpush1.msra.mxu0 %v138
    %1324 = vmatprep.subr.mxu0 0.0
    %1325 = vmatpush1.msra.mxu0 %v135
    %1326 = vmatprep.subr.mxu0 0.0
    %1327 = vmatpush1.msra.mxu0 %v132
    %1328 = vmatprep.subr.mxu0 0.0
    %1329 = vmatpush1.msra.mxu0 %v129
    %1330 = vmatprep.subr.mxu0 0.0
    %1331 = vmatpush1.msra.mxu0 %v126
    %1332 = vmatprep.subr.mxu0 0.0
    %1333 = vmatpush1.msra.mxu0 %v123
    %1334 = vmatprep.subr.mxu0 0.0
    %1335 = vmatpush1.msra.mxu0 %v120
    %1336 = vmatprep.subr.mxu0 0.0
    %1337 = vmatpush1.msra.mxu0 %v117
    %1338 = vmatprep.subr.mxu0 0.0
    %1339 = vmatpush1.msra.mxu0 %v114
    %1340 = vmatprep.subr.mxu0 0.0
    %1341 = vmatpush1.msra.mxu0 %v111
    %1342 = vmatprep.subr.mxu0 0.0
    %1343 = vmatpush1.msra.mxu0 %v108
    %1344 = vmatprep.subr.mxu0 0.0
    %1345 = vmatpush2.msra.mxu0 0.0
    %1346 = vmatprep.subr.mxu0 0.0
    %1347 = vmatpush2.msra.mxu0 0.0
    %1348 = vmatprep.subr.mxu0 0.0
    %1349 = vmatpush2.msra.mxu0 0.0
    %1350 = vmatprep.subr.mxu0 0.0
    %1351 = vmatpush2.msra.mxu0 0.0
    %1352 = vmatprep.subr.mxu0 0.0
    %1353 = vmatpush2.msra.mxu0 0.0
    %1354 = vmatprep.subr.mxu0 0.0
    %1355 = vmatpush2.msra.mxu0 0.0
    %1356 = vmatprep.subr.mxu0 0.0
    %1357 = vmatpush2.msra.mxu0 0.0
    %1358 = vmatprep.subr.mxu0 0.0
    %1359 = vmatpush2.msra.mxu0 0.0
    %1360 = vmatprep.subr.mxu0 0.0
    %1361 = vmatpush2.msra.mxu0 0.0
    %1362 = vmatprep.subr.mxu0 0.0
    %1363 = vmatpush2.msra.mxu0 0.0
    %1364 = vmatprep.subr.mxu0 0.0
    %1365 = vmatpush2.msra.mxu0 0.0
    %1366 = vmatprep.subr.mxu0 0.0
    %1367 = vmatpush2.msra.mxu0 0.0
    %1368 = vmatprep.subr.mxu0 0.0
    %1369 = vmatpush2.msra.mxu0 0.0
    %1370 = vmatprep.subr.mxu0 0.0
    %1371 = vmatpush2.msra.mxu0 0.0
    %1372 = vmatprep.subr.mxu0 0.0
    %1373 = vmatpush2.msra.mxu0 0.0
    %1374 = vmatprep.subr.mxu0 0.0
    %1375 = vmatpush2.msra.mxu0 0.0
    %1376 = vmatprep.mubr.f32.mxu0 0.0
    %1377 = vmatmul.mubr.f32.gmra.mxu0 %v1232
    %v1378 = vpop.f32.mrf.mxu0
    %v1379 = vadd.f32 %v273, %v1378
    %v1380 = vpop.f32.mrf.mxu0
    %1381 = vdwg.mxu0
    %1382 = vmatprep.subr.mxu0 %v201
    %1383 = vmatpush1.msra.mxu0 %v200
    %1384 = vmatprep.subr.mxu0 %v198
    %1385 = vmatpush1.msra.mxu0 %v197
    %1386 = vmatprep.subr.mxu0 %v195
    %1387 = vmatpush1.msra.mxu0 %v194
    %1388 = vmatprep.subr.mxu0 %v192
    %1389 = vmatpush1.msra.mxu0 %v191
    %1390 = vmatprep.subr.mxu0 %v189
    %1391 = vmatpush1.msra.mxu0 %v188
    %1392 = vmatprep.subr.mxu0 %v186
    %1393 = vmatpush1.msra.mxu0 %v185
    %1394 = vmatprep.subr.mxu0 %v183
    %1395 = vmatpush1.msra.mxu0 %v182
    %1396 = vmatprep.subr.mxu0 %v180
    %1397 = vmatpush1.msra.mxu0 %v179
    %1398 = vmatprep.subr.mxu0 %v177
    %1399 = vmatpush1.msra.mxu0 %v176
    %1400 = vmatprep.subr.mxu0 %v174
    %1401 = vmatpush1.msra.mxu0 %v173
    %1402 = vmatprep.subr.mxu0 %v171
    %1403 = vmatpush1.msra.mxu0 %v170
    %1404 = vmatprep.subr.mxu0 %v168
    %1405 = vmatpush1.msra.mxu0 %v167
    %1406 = vmatprep.subr.mxu0 %v165
    %1407 = vmatpush1.msra.mxu0 %v164
    %1408 = vmatprep.subr.mxu0 %v162
    %1409 = vmatpush1.msra.mxu0 %v161
    %1410 = vmatprep.subr.mxu0 %v159
    %1411 = vmatpush1.msra.mxu0 %v158
    %1412 = vmatprep.subr.mxu0 %v156
    %1413 = vmatpush1.msra.mxu0 %v155
    %1414 = vmatprep.subr.mxu0 %v249
    %1415 = vmatpush2.msra.mxu0 %v248
    %1416 = vmatprep.subr.mxu0 %v246
    %1417 = vmatpush2.msra.mxu0 %v245
    %1418 = vmatprep.subr.mxu0 %v243
    %1419 = vmatpush2.msra.mxu0 %v242
    %1420 = vmatprep.subr.mxu0 %v240
    %1421 = vmatpush2.msra.mxu0 %v239
    %1422 = vmatprep.subr.mxu0 %v237
    %1423 = vmatpush2.msra.mxu0 %v236
    %1424 = vmatprep.subr.mxu0 %v234
    %1425 = vmatpush2.msra.mxu0 %v233
    %1426 = vmatprep.subr.mxu0 %v231
    %1427 = vmatpush2.msra.mxu0 %v230
    %1428 = vmatprep.subr.mxu0 %v228
    %1429 = vmatpush2.msra.mxu0 %v227
    %1430 = vmatprep.subr.mxu0 %v225
    %1431 = vmatpush2.msra.mxu0 %v224
    %1432 = vmatprep.subr.mxu0 %v222
    %1433 = vmatpush2.msra.mxu0 %v221
    %1434 = vmatprep.subr.mxu0 %v219
    %1435 = vmatpush2.msra.mxu0 %v218
    %1436 = vmatprep.subr.mxu0 %v216
    %1437 = vmatpush2.msra.mxu0 %v215
    %1438 = vmatprep.subr.mxu0 %v213
    %1439 = vmatpush2.msra.mxu0 %v212
    %1440 = vmatprep.subr.mxu0 %v210
    %1441 = vmatpush2.msra.mxu0 %v209
    %1442 = vmatprep.subr.mxu0 %v207
    %1443 = vmatpush2.msra.mxu0 %v206
    %1444 = vmatprep.subr.mxu0 %v204
    %1445 = vmatpush2.msra.mxu0 %v203
    %1446 = vmatprep.mubr.f32.mxu0 %v1240
    %1447 = vmatmul.mubr.f32.gmra.mxu0 %v1236
    %v1448 = vpop.f32.mrf.mxu0
    %v1449 = vadd.f32 %v422, %v1448
    %v1450 = vpop.f32.mrf.mxu0
    %v1451 = vadd.f32 %v426, %v1450
    %1452 = vdwg.mxu0
    %1453 = vmatprep.subr.mxu0 0.0
    %1454 = vmatpush1.msra.mxu0 %v202
    %1455 = vmatprep.subr.mxu0 0.0
    %1456 = vmatpush1.msra.mxu0 %v199
    %1457 = vmatprep.subr.mxu0 0.0
    %1458 = vmatpush1.msra.mxu0 %v196
    %1459 = vmatprep.subr.mxu0 0.0
    %1460 = vmatpush1.msra.mxu0 %v193
    %1461 = vmatprep.subr.mxu0 0.0
    %1462 = vmatpush1.msra.mxu0 %v190
    %1463 = vmatprep.subr.mxu0 0.0
    %1464 = vmatpush1.msra.mxu0 %v187
    %1465 = vmatprep.subr.mxu0 0.0
    %1466 = vmatpush1.msra.mxu0 %v184
    %1467 = vmatprep.subr.mxu0 0.0
    %1468 = vmatpush1.msra.mxu0 %v181
    %1469 = vmatprep.subr.mxu0 0.0
    %1470 = vmatpush1.msra.mxu0 %v178
    %1471 = vmatprep.subr.mxu0 0.0
    %1472 = vmatpush1.msra.mxu0 %v175
    %1473 = vmatprep.subr.mxu0 0.0
    %1474 = vmatpush1.msra.mxu0 %v172
    %1475 = vmatprep.subr.mxu0 0.0
    %1476 = vmatpush1.msra.mxu0 %v169
    %1477 = vmatprep.subr.mxu0 0.0
    %1478 = vmatpush1.msra.mxu0 %v166
    %1479 = vmatprep.subr.mxu0 0.0
    %1480 = vmatpush1.msra.mxu0 %v163
    %1481 = vmatprep.subr.mxu0 0.0
    %1482 = vmatpush1.msra.mxu0 %v160
    %1483 = vmatprep.subr.mxu0 0.0
    %1484 = vmatpush1.msra.mxu0 %v157
    %1485 = vmatprep.subr.mxu0 0.0
    %1486 = vmatpush2.msra.mxu0 %v250
    %1487 = vmatprep.subr.mxu0 0.0
    %1488 = vmatpush2.msra.mxu0 %v247
    %1489 = vmatprep.subr.mxu0 0.0
    %1490 = vmatpush2.msra.mxu0 %v244
    %1491 = vmatprep.subr.mxu0 0.0
    %1492 = vmatpush2.msra.mxu0 %v241
    %1493 = vmatprep.subr.mxu0 0.0
    %1494 = vmatpush2.msra.mxu0 %v238
    %1495 = vmatprep.subr.mxu0 0.0
    %1496 = vmatpush2.msra.mxu0 %v235
    %1497 = vmatprep.subr.mxu0 0.0
    %1498 = vmatpush2.msra.mxu0 %v232
    %1499 = vmatprep.subr.mxu0 0.0
    %1500 = vmatpush2.msra.mxu0 %v229
    %1501 = vmatprep.subr.mxu0 0.0
    %1502 = vmatpush2.msra.mxu0 %v226
    %1503 = vmatprep.subr.mxu0 0.0
    %1504 = vmatpush2.msra.mxu0 %v223
    %1505 = vmatprep.subr.mxu0 0.0
    %1506 = vmatpush2.msra.mxu0 %v220
    %1507 = vmatprep.subr.mxu0 0.0
    %1508 = vmatpush2.msra.mxu0 %v217
    %1509 = vmatprep.subr.mxu0 0.0
    %1510 = vmatpush2.msra.mxu0 %v214
    %1511 = vmatprep.subr.mxu0 0.0
    %1512 = vmatpush2.msra.mxu0 %v211
    %1513 = vmatprep.subr.mxu0 0.0
    %1514 = vmatpush2.msra.mxu0 %v208
    %1515 = vmatprep.subr.mxu0 0.0
    %1516 = vmatpush2.msra.mxu0 %v205
    %1517 = vmatprep.mubr.f32.mxu0 %v1240
    %1518 = vmatmul.mubr.f32.gmra.mxu0 %v1236
    %v1519 = vpop.f32.mrf.mxu0
    %v1520 = vadd.f32 %v430, %v1519
    %v1521 = vpop.f32.mrf.mxu0
    %1522 = vdwg.mxu0
    %v1523 = vadd.f32 %v1308, %v1449
    %v1524 = vxor.u32 %v1523, 2147483648
    %v1525 = vmul.f32 %v1524, 1.442695
    %v1526 = vpow.pop %v1525
    %v1527 = vadd.f32 %v1526, 1.0
    %v1528 = vrcp.pop %v1527
    %v1529 = vmul.f32 1.0, %v1528
    %v1530 = vadd.f32 %v1310, %v1451
    %v1531 = vxor.u32 %v1530, 2147483648
    %v1532 = vmul.f32 %v1531, 1.442695
    %v1533 = vpow.pop %v1532
    %v1534 = vadd.f32 %v1533, 1.0
    %v1535 = vrcp.pop %v1534
    %v1536 = vmul.f32 1.0, %v1535
    %v1537 = vmul.f32 %v1529, %v1520
    %v1538 = vadd.f32 %v1379, %v1537
    %v1539 = vtanh.pop %v1538
    %v1540 = vadd.f32 %v1236, %v1240
    %v1541 = vmul.f32 %v1540, 0.5
    %v1542 = vsub.f32 %v1541, %v1539
    %v1543 = vmul.f32 %v1536, %v1542
    %v1544 = vadd.f32 %v1539, %v1543
    %s1545 = scalar_lea.vmem [#allocation2], 32
    %1546 = vst [vmem:[%s1545] sm:$0xff] %v1544
    %v1547 = vld [vmem:[%s1545] sm:$0xff]
    %v1548 = vld [vmem:[#allocation11] sm:$0xff]
    %v1549 = vld [vmem:[#allocation11 + $0x8] sm:$0xff]
    %v1550 = vld [vmem:[#allocation11 + $0x10] sm:$0xff]
    %v1551 = vld [vmem:[#allocation11 + $0x18] sm:$0xff]
    %v1552 = vld [vmem:[#allocation11 + $0x20] sm:$0xff]
    %v1553 = vld [vmem:[#allocation11 + $0x28] sm:$0xff]
    %v1554 = vld [vmem:[#allocation11 + $0x30] sm:$0xff]
    %v1555 = vld [vmem:[#allocation11 + $0x38] sm:$0xff]
    %v1556 = vld [vmem:[#allocation11 + $0x40] sm:$0xff]
    %v1557 = vld [vmem:[#allocation11 + $0x48] sm:$0xff]
    %v1558 = vld [vmem:[#allocation11 + $0x50] sm:$0xff]
    %v1559 = vld [vmem:[#allocation11 + $0x58] sm:$0xff]
    %v1560 = vld [vmem:[#allocation11 + $0x60] sm:$0xff]
    %v1561 = vld [vmem:[#allocation11 + $0x68] sm:$0xff]
    %v1562 = vld [vmem:[#allocation11 + $0x70] sm:$0xff]
    %v1563 = vld [vmem:[#allocation11 + $0x78] sm:$0xff]
    %v1564 = vld [vmem:[#allocation11 + $0x80] sm:$0xff]
    %v1565 = vld [vmem:[#allocation11 + $0x88] sm:$0xff]
    %v1566 = vld [vmem:[#allocation11 + $0x90] sm:$0xff]
    %v1567 = vld [vmem:[#allocation11 + $0x98] sm:$0xff]
    %v1568 = vld [vmem:[#allocation11 + $0xa0] sm:$0xff]
    %v1569 = vld [vmem:[#allocation11 + $0xa8] sm:$0xff]
    %v1570 = vld [vmem:[#allocation11 + $0xb0] sm:$0xff]
    %v1571 = vld [vmem:[#allocation11 + $0xb8] sm:$0xff]
    %v1572 = vld [vmem:[#allocation11 + $0xc0] sm:$0xff]
    %v1573 = vld [vmem:[#allocation11 + $0xc8] sm:$0xff]
    %v1574 = vld [vmem:[#allocation11 + $0xd0] sm:$0xff]
    %v1575 = vld [vmem:[#allocation11 + $0xd8] sm:$0xff]
    %v1576 = vld [vmem:[#allocation11 + $0xe0] sm:$0xff]
    %v1577 = vld [vmem:[#allocation11 + $0xe8] sm:$0xff]
    %v1578 = vld [vmem:[#allocation11 + $0xf0] sm:$0xff]
    %v1579 = vld [vmem:[#allocation11 + $0xf8] sm:$0xff]
    %v1580 = vld [vmem:[#allocation13] sm:$0x3]
    %v1582 = vlaneseq
    %v1583 = vshrl.u32 %v1582, 7
    %v1584 = vsub.s32 0, %v1583
    %v1585 = vrot.slane %v1580, %v1584
    %v1586 = vlaneseq
    %v1587 = vshrl.u32 %v1586, 7
    %v1588 = vsub.s32 1, %v1587
    %v1589 = vrot.slane %v1580, %v1588
    %1592 = vmatprep.subr.mxu0 %v1579
    %1593 = vmatpush1.msra.mxu0 %v1578
    %1594 = vmatprep.subr.mxu0 %v1577
    %1595 = vmatpush1.msra.mxu0 %v1576
    %1596 = vmatprep.subr.mxu0 %v1575
    %1597 = vmatpush1.msra.mxu0 %v1574
    %1598 = vmatprep.subr.mxu0 %v1573
    %1599 = vmatpush1.msra.mxu0 %v1572
    %1600 = vmatprep.subr.mxu0 %v1571
    %1601 = vmatpush1.msra.mxu0 %v1570
    %1602 = vmatprep.subr.mxu0 %v1569
    %1603 = vmatpush1.msra.mxu0 %v1568
    %1604 = vmatprep.subr.mxu0 %v1567
    %1605 = vmatpush1.msra.mxu0 %v1566
    %1606 = vmatprep.subr.mxu0 %v1565
    %1607 = vmatpush1.msra.mxu0 %v1564
    %1608 = vmatprep.subr.mxu0 %v1563
    %1609 = vmatpush1.msra.mxu0 %v1562
    %1610 = vmatprep.subr.mxu0 %v1561
    %1611 = vmatpush1.msra.mxu0 %v1560
    %1612 = vmatprep.subr.mxu0 %v1559
    %1613 = vmatpush1.msra.mxu0 %v1558
    %1614 = vmatprep.subr.mxu0 %v1557
    %1615 = vmatpush1.msra.mxu0 %v1556
    %1616 = vmatprep.subr.mxu0 %v1555
    %1617 = vmatpush1.msra.mxu0 %v1554
    %1618 = vmatprep.subr.mxu0 %v1553
    %1619 = vmatpush1.msra.mxu0 %v1552
    %1620 = vmatprep.subr.mxu0 %v1551
    %1621 = vmatpush1.msra.mxu0 %v1550
    %1622 = vmatprep.subr.mxu0 %v1549
    %1623 = vmatpush1.msra.mxu0 %v1548
    %1624 = vmatprep.subr.mxu0 0.0
    %1625 = vmatpush2.msra.mxu0 0.0
    %1626 = vmatprep.subr.mxu0 0.0
    %1627 = vmatpush2.msra.mxu0 0.0
    %1628 = vmatprep.subr.mxu0 0.0
    %1629 = vmatpush2.msra.mxu0 0.0
    %1630 = vmatprep.subr.mxu0 0.0
    %1631 = vmatpush2.msra.mxu0 0.0
    %1632 = vmatprep.subr.mxu0 0.0
    %1633 = vmatpush2.msra.mxu0 0.0
    %1634 = vmatprep.subr.mxu0 0.0
    %1635 = vmatpush2.msra.mxu0 0.0
    %1636 = vmatprep.subr.mxu0 0.0
    %1637 = vmatpush2.msra.mxu0 0.0
    %1638 = vmatprep.subr.mxu0 0.0
    %1639 = vmatpush2.msra.mxu0 0.0
    %1640 = vmatprep.subr.mxu0 0.0
    %1641 = vmatpush2.msra.mxu0 0.0
    %1642 = vmatprep.subr.mxu0 0.0
    %1643 = vmatpush2.msra.mxu0 0.0
    %1644 = vmatprep.subr.mxu0 0.0
    %1645 = vmatpush2.msra.mxu0 0.0
    %1646 = vmatprep.subr.mxu0 0.0
    %1647 = vmatpush2.msra.mxu0 0.0
    %1648 = vmatprep.subr.mxu0 0.0
    %1649 = vmatpush2.msra.mxu0 0.0
    %1650 = vmatprep.subr.mxu0 0.0
    %1651 = vmatpush2.msra.mxu0 0.0
    %1652 = vmatprep.subr.mxu0 0.0
    %1653 = vmatpush2.msra.mxu0 0.0
    %1654 = vmatprep.subr.mxu0 0.0
    %1655 = vmatpush2.msra.mxu0 0.0
    %1656 = vmatprep.mubr.f32.mxu0 0.0
    %1657 = vmatmul.mubr.f32.gmra.mxu0 %v1547
    %v1658 = vpop.f32.mrf.mxu0
    %v1659 = vadd.f32 %v1585, %v1658
    %v1660 = vpop.f32.mrf.mxu0
    %v1661 = vadd.f32 %v1589, %v1660
    %1662 = vdwg.mxu0
    %1663 = vst [vmem:[#allocation14] sm:$0xff] %v1659
    %1664 = vst [vmem:[#allocation15] sm:$0xff] %v1661
    %v1665 = vld [vmem:[%s8] sm:$0xff]
    %v1666 = vmul.f32 %v1661, 0.5
    %v1667 = vmul.f32 %v1666, 1.442695
    %v1668 = vpow.pop %v1667
    %v1669 = vmul.f32 %v1665, %v1668
    %v1670 = vadd.f32 %v1659, %v1669
    %1671 = vst [vmem:[#allocation17] sm:$0xff] %v1670
    // Predicated region
    $region54: #{_encoder_pallas.1} parent=1 // pred_check
      _
    $region55: #{_encoder_pallas.1} parent=1 // pred_check_branch
      %1673 = sbr.rel (0) target = $region57
    $region56: #{_encoder_pallas.1} parent=1 // pred_region
      %s1675 = ssub.s32 128, 128
      %1676 = vsyncadd [#allocation7], %s1675
      %s1678 = sshll.u32 [#allocation14], 4
      %s1679 = int_to_ptr.vmem [resolvable:$true] %s1678
      %1681 = dma.vmem_to_hbm [thread:$0]  %s1679, 128, %s9, [#allocation7]
    $region57: #{_encoder_pallas.1} parent=1 // pred_fallthru
      _
    // Predicated region
    $region58: #{_encoder_pallas.1} parent=1 // pred_check
      _
    $region59: #{_encoder_pallas.1} parent=1 // pred_check_branch
      %1683 = sbr.rel (0) target = $region61
    $region60: #{_encoder_pallas.1} parent=1 // pred_region
      %s1685 = ssub.s32 128, 128
      %1686 = vsyncadd [#allocation16], %s1685
      %s1688 = sshll.u32 [#allocation15], 4
      %s1689 = int_to_ptr.vmem [resolvable:$true] %s1688
      %1691 = dma.vmem_to_hbm [thread:$0]  %s1689, 128, %s10, [#allocation16]
    $region61: #{_encoder_pallas.1} parent=1 // pred_fallthru
      _
    // Predicated region
    $region62: #{_encoder_pallas.1} parent=1 // pred_check
      _
    $region63: #{_encoder_pallas.1} parent=1 // pred_check_branch
      %1693 = sbr.rel (0) target = $region65
    $region64: #{_encoder_pallas.1} parent=1 // pred_region
      %s1695 = ssub.s32 128, 128
      %1696 = vsyncadd [#allocation16], %s1695
      %s1698 = sshll.u32 [#allocation17], 4
      %s1699 = int_to_ptr.vmem [resolvable:$true] %s1698
      %1701 = dma.vmem_to_hbm [thread:$0]  %s1699, 128, %s11, [#allocation16]
    $region65: #{_encoder_pallas.1} parent=1 // pred_fallthru
      _
    // Predicated region
    $region66: #{_encoder_pallas.1} parent=1 // pred_check
      _
    $region67: #{_encoder_pallas.1} parent=1 // pred_check_branch
      %1703 = sbr.rel (0) target = $region69
    $region68: #{_encoder_pallas.1} parent=1 // pred_region
      %1704 = dma.done [#allocation7], 128
    $region69: #{_encoder_pallas.1} parent=1 // pred_fallthru
      _
    // Predicated region
    $region70: #{_encoder_pallas.1} parent=1 // pred_check
      _
    $region71: #{_encoder_pallas.1} parent=1 // pred_check_branch
      %1706 = sbr.rel (0) target = $region73
    $region72: #{_encoder_pallas.1} parent=1 // pred_region
      %1707 = dma.done [#allocation16], 128
    $region73: #{_encoder_pallas.1} parent=1 // pred_fallthru
      _
    // Predicated region
    $region74: #{_encoder_pallas.1} parent=1 // pred_check
      _
    $region75: #{_encoder_pallas.1} parent=1 // pred_check_branch
      %1709 = sbr.rel (0) target = $region77
    $region76: #{_encoder_pallas.1} parent=1 // pred_region
      %1710 = dma.done [#allocation16], 128
    $region77: #{_encoder_pallas.1} parent=1 // pred_fallthru
      _
    %1711 = vsyncpa [#allocation6], 1
    %1712 = vsyncpa [#allocation9], 1
    %1713 = vsyncpa [#allocation12], 1
    %1714 = vsyncpa [#allocation7], 1
    %1715 = vsyncpa [#allocation16], 1

</llo_original>
